<compile_context>
chip_gen: v7x
topology: tpu7x:2x2x1
jax: 0.10.0
libtpu: 0.0.40
codegen_flags: <defaults>
</compile_context>

<pallas_src>
import math
import functools

import jax
import jax.numpy as jnp
from jax.experimental import pallas as pl
from jax.experimental.pallas import tpu as pltpu

FOURIER = 0                      # cf.FOURIER: 0 -> Conv2d(3,3,33), 1 -> Conv2d(1,3,33)
BN_EPS = 1e-5
BN_SCALE = 1.0 / math.sqrt(1.0 + BN_EPS)   # eval-mode BN with default running stats


def _ru(v, m):
    return ((v + m - 1) // m) * m


def _cdiv(a, b):
    return -(-a // b)


def _vmem_limit_bytes():
    """Generation-aware scoped-VMEM budget: ~48 MiB on v7x (64 MiB), up to 96 MiB on v5e/v6e."""
    cap = 64 * 1024 * 1024
    try:
        info = pltpu.get_tpu_info()
        cap = int(getattr(info, "vmem_capacity_bytes", cap))
    except Exception:
        pass
    return max(32 * 1024 * 1024, min(cap * 3 // 4, 96 * 1024 * 1024))


_VMEM_LIMIT = _vmem_limit_bytes()


# -----------------------------------------------------------------------------
# Pallas kernels (refs are already squeezed to 2-D: x (tm,K), w (K,Np), v (R,Np))
# -----------------------------------------------------------------------------
def _mm_kernel(x_ref, w_ref, v_ref, o_ref, *, relu, has_gamma):
    """o = [relu](x@w * v[0] + v[1]) [* v[2] + v[3]]   (single K/N block, f32 accum)."""
    acc = jnp.dot(x_ref[...], w_ref[...], preferred_element_type=jnp.float32)
    v = v_ref[...]
    y = acc * v[0:1, :] + v[1:2, :]
    if relu:
        y = jnp.maximum(y, 0.0)
    if has_gamma:
        y = y * v[2:3, :] + v[3:4, :]
    o_ref[...] = y.astype(o_ref.dtype)


def _mm_residual_kernel(x_ref, w_ref, v_ref, r_ref, o_ref):
    """o = relu(x@w * v[0] + v[1] + residual)  -- bottleneck conv3 + residual fused."""
    acc = jnp.dot(x_ref[...], w_ref[...], preferred_element_type=jnp.float32)
    v = v_ref[...]
    y = acc * v[0:1, :] + v[1:2, :] + r_ref[...].astype(jnp.float32)
    o_ref[...] = jnp.maximum(y, 0.0).astype(o_ref.dtype)


# -----------------------------------------------------------------------------
# Pallas wrapper: stacked, weight-resident fused matmul
# -----------------------------------------------------------------------------
def matmul_fused(x, w, vec, *, relu, has_gamma, residual=None, out_dtype=jnp.float32):
    """x: (M,K) shared or (T,M,K) per-trunk, bf16-castable.
       w: (T,K,Np) bf16 (Np a 128-multiple), vec: (T,R,Np) f32 packed epilogue,
       residual: (T,M,Np) or None.  Returns (T,M,Np) out_dtype.

    Grid = (T, M blocks), both "parallel" (v7x: one trunk per TensorCore).  The weight /
    epilogue block index depends only on the OUTER axis t, so each weight is DMA'd exactly
    once per trunk (no re-streaming across M blocks), and stays resident in VMEM."""
    T, K, Np = w.shape
    shared = (x.ndim == 2)
    M = x.shape[0] if shared else x.shape[1]
    assert x.shape[-1] == K and vec.shape[0] == T and vec.shape[2] == Np
    x = x.astype(jnp.bfloat16)

    # Single M block when M <= 256 ("full dim" exemption from the 8-row rule -> no M padding);
    # otherwise 256-row tiles, last block partial (benign: no cross-row reduction in the kernel).
    tm = M if M <= 256 else 256
    grid = (T, _cdiv(M, tm))

    if shared:
        x_spec = pl.BlockSpec((tm, K), lambda t, i: (i, 0))
    else:
        x_spec = pl.BlockSpec((None, tm, K), lambda t, i: (t, i, 0))
    w_spec = pl.BlockSpec((None, K, Np), lambda t, i: (t, 0, 0))        # resident per trunk
    v_spec = pl.BlockSpec((None, vec.shape[1], Np), lambda t, i: (t, 0, 0))
    o_spec = pl.BlockSpec((None, tm, Np), lambda t, i: (t, i, 0))       # lane-dense full-N out

    out_bytes = 2 if out_dtype == jnp.bfloat16 else 4
    bytes_accessed = ((1 if shared else T) * M * K * 2 + T * K * Np * 2
                      + T * vec.shape[1] * Np * 4 + T * M * Np * out_bytes)

    if residual is None:
        kernel = functools.partial(_mm_kernel, relu=relu, has_gamma=has_gamma)
        in_specs = [x_spec, w_spec, v_spec]
        args = (x, w, vec)
    else:
        assert residual.shape == (T, M, Np)
        kernel = _mm_residual_kernel
        r_spec = pl.BlockSpec((None, tm, Np), lambda t, i: (t, i, 0))
        in_specs = [x_spec, w_spec, v_spec, r_spec]
        args = (x, w, vec, residual)
        bytes_accessed += T * M * Np * int(residual.dtype.itemsize)

    return pl.pallas_call(
        kernel,
        out_shape=jax.ShapeDtypeStruct((T, M, Np), out_dtype),
        grid_spec=pltpu.PrefetchScalarGridSpec(
            num_scalar_prefetch=0,
            grid=grid,
            in_specs=in_specs,
            out_specs=o_spec),
        compiler_params=pltpu.CompilerParams(
            dimension_semantics=("parallel", "parallel"),
            vmem_limit_bytes=_VMEM_LIMIT),
        cost_estimate=pl.CostEstimate(
            flops=2 * T * M * K * Np,
            transcendentals=0,
            bytes_accessed=int(bytes_accessed)),
    )(*args)


def conv2d_fused(x, pw, kh, kw, stride, padding, *, relu=True, residual=None,
                 out_dtype=jnp.bfloat16):
    """Conv (NHWC) -> fused Pallas matmul.
       x: (N,H,W,C) shared across the T stacked weights, or (T,N,H,W,C) per-trunk.
       pw = {'w': (T, taps*C, Np) bf16, 'vec': (T, R, Np) f32}.  Returns (T,N,Ho,Wo,Np)."""
    w = pw['w']
    T, _, Np = w.shape
    shared = (x.ndim == 4)
    xb = x if shared else x.reshape((-1,) + x.shape[-3:])           # (T*N, H, W, C)
    xb = xb.astype(jnp.bfloat16)
    if kh == 1 and kw == 1 and padding == 0:
        patches = xb if stride == 1 else xb[:, ::stride, ::stride, :]
    else:
        # TODO(synk): in-kernel tap accumulation (no im2col materialization) for the 33x33 /
        # 7x7 / 3x3 convs is not implemented; patches are emitted in bf16 to halve HBM traffic.
        patches = jax.lax.conv_general_dilated_patches(
            xb, filter_shape=(kh, kw), window_strides=(stride, stride),
            padding=((padding, padding), (padding, padding)),
            dimension_numbers=('NHWC', 'HWIO', 'NHWC'))
    Ho, Wo, Kf = patches.shape[1], patches.shape[2], patches.shape[3]
    if shared:
        n = x.shape[0]
        pm = patches.reshape(n * Ho * Wo, Kf)
    else:
        n = x.shape[1]
        pm = patches.reshape(T, n * Ho * Wo, Kf)
    rm = None
    if residual is not None:
        rm = residual.reshape(T, n * Ho * Wo, residual.shape[-1])
    y = matmul_fused(pm, w, pw['vec'], relu=relu, has_gamma=False,
                     residual=rm, out_dtype=out_dtype)
    return y.reshape(T, n, Ho, Wo, Np)


def maxpool_3x3_s2_p1(x):
    """nn.MaxPool2d(3, stride=2, padding=1), layout (..., H, W, C). Fused max of 9 shifted
    strided slices (XLA fuses; no 9x window materialization). Zero-valued padded channel
    lanes stay exactly zero."""
    *lead, H, W, C = x.shape
    Ho = (H + 2 - 3) // 2 + 1
    Wo = (W + 2 - 3) // 2 + 1
    pad_cfg = [(0, 0)] * len(lead) + [(1, 1), (1, 1), (0, 0)]
    xp = jnp.pad(x, pad_cfg, constant_values=-jnp.inf)
    out = None
    for i in range(3):
        for j in range(3):
            win = xp[..., i:i + 2 * (Ho - 1) + 1:2, j:j + 2 * (Wo - 1) + 1:2, :]
            out = win if out is None else jnp.maximum(out, win)
    return out


def global_avg_pool(x):
    """AdaptiveAvgPool2d(1) + flatten, (T,N,H,W,C) -> (T,N,C)."""
    return jnp.mean(x.astype(jnp.float32), axis=(-3, -2))


# -----------------------------------------------------------------------------
# Model definition (two stacked ResNet-50 trunks + MLP head), synthetic params
# -----------------------------------------------------------------------------
_STAGES = [(64, 3, 1), (128, 4, 2), (256, 6, 2), (512, 3, 2)]


def _block_cfg():
    cfg = []
    cin = 64
    for planes, n, stride in _STAGES:
        for b in range(n):
            cfg.append((cin, planes, stride if b == 0 else 1, b == 0))
            cin = planes * 4
    return tuple(cfg)


BLOCK_CFG = _block_cfg()   # static (cin, planes, stride, has_downsample) per bottleneck


class ParamGen:
    def __init__(self, key):
        self._key = key
        self._n = 0

    def normal(self, shape, fan_in):
        self._n += 1
        k = jax.random.fold_in(self._key, self._n)
        return jax.random.normal(k, shape, jnp.float32) * math.sqrt(2.0 / fan_in)


def bn_pair(c):
    # eval-mode BN with default stats: scale = 1/sqrt(1+eps), shift = 0
    return (jnp.full((c,), BN_SCALE, jnp.float32), jnp.zeros((c,), jnp.float32))


def prep_mm(pg, k_rows, n_real, alpha, beta, gamma=None, delta=None, *, stack=1, fan_in=None):
    """Build-time prep: generate `stack` synthetic weights of shape (k_rows, n_real), pad the
    output dim to a 128-multiple with ZERO columns (so padded output lanes are exactly zero
    after the zero-padded epilogue), cast to bf16, and stack along a leading T axis.
    k_rows is the *carried* (lane-padded) patch width; weight rows that multiply padded
    (always-zero) input lanes are harmless for this synthetic-weight model."""
    n_pad = _ru(n_real, 128)
    rows = [alpha, beta] if gamma is None else [alpha, beta, gamma, delta]
    vec1 = jnp.stack([jnp.pad(r.astype(jnp.float32), (0, n_pad - n_real)) for r in rows])
    ws, vs = [], []
    for _ in range(stack):
        wr = pg.normal((k_rows, n_real), fan_in if fan_in is not None else k_rows)
        ws.append(jnp.pad(wr, ((0, 0), (0, n_pad - n_real))).astype(jnp.bfloat16))
        vs.append(vec1)
    return {'w': jnp.stack(ws), 'vec': jnp.stack(vs)}


def make_resnet_params(pg, stack=2):
    """Both ResNet-50 trunks, weights stacked along a leading T=stack axis per layer."""
    p = {'conv1': prep_mm(pg, 3 * 49, 64, *bn_pair(64), stack=stack, fan_in=3 * 49),
         'blocks': []}
    for cin, planes, stride, has_ds in BLOCK_CFG:
        cin_c = _ru(cin, 128)      # carried (lane-padded) width of the block input
        mid_c = _ru(planes, 128)   # carried width of the c1/c2 outputs
        bp = {
            'c1': prep_mm(pg, cin_c, planes, *bn_pair(planes), stack=stack, fan_in=cin),
            'c2': prep_mm(pg, 9 * mid_c, planes, *bn_pair(planes), stack=stack,
                          fan_in=9 * planes),
            'c3': prep_mm(pg, mid_c, planes * 4, *bn_pair(planes * 4), stack=stack,
                          fan_in=planes),
        }
        if has_ds:
            bp['ds'] = prep_mm(pg, cin_c, planes * 4, *bn_pair(planes * 4), stack=stack,
                               fan_in=cin)
        p['blocks'].append(bp)
    return p


def make_front_params(pg):
    cin = 3 if FOURIER == 0 else 1
    scale, shift = bn_pair(3)
    bias = jnp.zeros((3,), jnp.float32)
    # Conv bias folded into the BN shift: relu(acc*scale + (bias*scale + shift))
    return prep_mm(pg, cin * 33 * 33, 3, scale, bias * scale + shift,
                   stack=1, fan_in=cin * 33 * 33)


def make_fc_params(pg):
    def lin_bn(k, n):
        scale, shift = bn_pair(n)
        # Linear(+bias=0) -> ReLU -> Dropout(identity) -> BatchNorm1d
        return prep_mm(pg, k, n,
                       jnp.ones((n,), jnp.float32), jnp.zeros((n,), jnp.float32),
                       scale, shift, stack=1, fan_in=k)
    return {
        'l1': lin_bn(4096, 1024),
        'l2': lin_bn(1024, 512),
        'l3': lin_bn(512, 256),
        'l4': prep_mm(pg, 256, 2, jnp.ones((2,), jnp.float32), jnp.zeros((2,), jnp.float32),
                      stack=1, fan_in=256),
    }


# -----------------------------------------------------------------------------
# Forward pass
# -----------------------------------------------------------------------------
def _front_forward(images_nchw, p):
    x = jnp.transpose(images_nchw, (0, 2, 3, 1))              # NCHW -> NHWC
    y = conv2d_fused(x, p, 33, 33, 1, 0, relu=True)           # (1, N, Ho, Wo, 128)
    return y[0, ..., :3]                                      # static crop to 3 real channels


def _trunks_forward(x, p):
    """x: (N,H,W,3) shared front-conv output.  Runs BOTH trunks (stacked, T=2)."""
    x = conv2d_fused(x, p['conv1'], 7, 7, 2, 3, relu=True)    # (2, N, H', W', 128)
    x = maxpool_3x3_s2_p1(x)
    for (cin, planes, stride, has_ds), bp in zip(BLOCK_CFG, p['blocks']):
        identity = x
        out = conv2d_fused(x, bp['c1'], 1, 1, 1, 0, relu=True)
        out = conv2d_fused(out, bp['c2'], 3, 3, stride, 1, relu=True)
        if has_ds:
            identity = conv2d_fused(x, bp['ds'], 1, 1, stride, 0, relu=False)
        # conv3 + BN + residual add + ReLU fused into one kernel epilogue
        x = conv2d_fused(out, bp['c3'], 1, 1, 1, 0, residual=identity)
    return global_avg_pool(x)                                 # (2, N, 2048) f32


def _head_forward(pooled, p):
    x = jnp.concatenate([pooled[0], pooled[1]], axis=-1)      # (N, 4096)
    x = matmul_fused(x, p['l1']['w'], p['l1']['vec'], relu=True, has_gamma=True)[0]
    x = matmul_fused(x, p['l2']['w'], p['l2']['vec'], relu=True, has_gamma=True)[0]
    x = matmul_fused(x, p['l3']['w'], p['l3']['vec'], relu=True, has_gamma=True)[0]
    x = matmul_fused(x, p['l4']['w'], p['l4']['vec'], relu=False, has_gamma=False)[0]
    return x[:, :2]                                           # static crop to 2 logits


front_forward = jax.jit(_front_forward)
trunks_forward = jax.jit(_trunks_forward)   # one compilation covers both trunks (stacked)
head_forward = jax.jit(_head_forward)


if __name__ == "__main__":
    key = jax.random.PRNGKey(0)
    pg = ParamGen(jax.random.fold_in(key, 1))

    params = {
        'conv': make_front_params(pg),
        'resnet': make_resnet_params(pg, stack=2),   # trunk 0 and trunk 1 stacked per layer
        'fc': make_fc_params(pg),
    }

    N = 2
    Cin = 3 if FOURIER == 0 else 1
    H = W = 36   # conv33 -> 4x4; resnet stem -> 2x2; maxpool -> 1x1 (small test shapes)
    images = jax.random.normal(jax.random.fold_in(key, 0), (N, Cin, H, W), jnp.float32)

    x = front_forward(images, params['conv'])        # (N, 4, 4, 3)
    pooled = trunks_forward(x, params['resnet'])     # (2, N, 2048)
    out = head_forward(pooled, params['fc'])         # (N, 2)
    out = jax.block_until_ready(out)

    assert out.shape == (N, 2)
    assert bool(jnp.all(jnp.isfinite(out)))
    print("KERNEL_OK")
</pallas_src>

<mosaic_0001>
module attributes {stable_mosaic.version = 11 : i64} {
  func.func @_mm_kernel(%arg0: i32, %arg1: i32, %arg2: memref<32x3267xbf16, #tpu.memory_space<vmem>>, %arg3: memref<1x3267x128xbf16, #tpu.memory_space<vmem>>, %arg4: memref<1x2x128xf32, #tpu.memory_space<vmem>>, %arg5: memref<1x32x128xbf16, #tpu.memory_space<vmem>>) attributes {dimension_semantics = [#tpu.dimension_semantics<parallel>, #tpu.dimension_semantics<parallel>], iteration_bounds = array<i64: 1, 1>, scalar_prefetch = 0 : i64, scratch_operands = 0 : i64, tpu.core_type = #tpu.core_type<tc>, window_params = [{transform_indices = @transform_0, window_bounds = array<i64: 32, 3267>}, {transform_indices = @transform_1, window_bounds = array<i64: 1, 3267, 128>}, {transform_indices = @transform_2, window_bounds = array<i64: 1, 2, 128>}, {transform_indices = @transform_3, window_bounds = array<i64: 1, 32, 128>}]} {
    %c0 = arith.constant 0 : index
    %c0_0 = arith.constant 0 : index
    %0 = vector.load %arg2[%c0, %c0_0] : memref<32x3267xbf16, #tpu.memory_space<vmem>>, vector<32x3267xbf16>
    %c0_1 = arith.constant 0 : index
    %c0_2 = arith.constant 0 : index
    %c0_3 = arith.constant 0 : index
    %1 = vector.load %arg3[%c0_1, %c0_2, %c0_3] : memref<1x3267x128xbf16, #tpu.memory_space<vmem>>, vector<1x3267x128xbf16>
    %2 = vector.shape_cast %1 : vector<1x3267x128xbf16> to vector<3267x128xbf16>
    %cst = arith.constant dense<0.000000e+00> : vector<32x128xf32>
    %3 = tpu.matmul %0, %2, %cst {dimension_numbers = #tpu.dot_dimension_numbers<[1], [0], [0], [1], [0, 0, 1, 1], [], []>} : vector<32x3267xbf16>, vector<3267x128xbf16>, vector<32x128xf32> -> vector<32x128xf32>
    %c0_4 = arith.constant 0 : index
    %c0_5 = arith.constant 0 : index
    %c0_6 = arith.constant 0 : index
    %4 = vector.load %arg4[%c0_4, %c0_5, %c0_6] : memref<1x2x128xf32, #tpu.memory_space<vmem>>, vector<1x2x128xf32>
    %5 = vector.shape_cast %4 : vector<1x2x128xf32> to vector<2x128xf32>
    %6 = vector.extract_strided_slice %5 {offsets = [0, 0], sizes = [1, 128], strides = [1, 1]} : vector<2x128xf32> to vector<1x128xf32>
    %7 = vector.broadcast %6 : vector<1x128xf32> to vector<32x128xf32>
    %8 = arith.mulf %3, %7 : vector<32x128xf32>
    %9 = vector.extract_strided_slice %5 {offsets = [1, 0], sizes = [1, 128], strides = [1, 1]} : vector<2x128xf32> to vector<1x128xf32>
    %10 = vector.broadcast %9 : vector<1x128xf32> to vector<32x128xf32>
    %11 = arith.addf %8, %10 : vector<32x128xf32>
    %cst_7 = arith.constant 0.000000e+00 : f32
    %12 = vector.broadcast %cst_7 : f32 to vector<32x128xf32>
    %13 = arith.maximumf %11, %12 : vector<32x128xf32>
    %14 = arith.truncf %13 : vector<32x128xf32> to vector<32x128xbf16>
    %c0_8 = arith.constant 0 : index
    %c0_9 = arith.constant 0 : index
    %c0_10 = arith.constant 0 : index
    %15 = vector.load %arg5[%c0_8, %c0_9, %c0_10] : memref<1x32x128xbf16, #tpu.memory_space<vmem>>, vector<1x32x128xbf16>
    %16 = vector.shape_cast %15 : vector<1x32x128xbf16> to vector<32x128xbf16>
    %17 = vector.shape_cast %14 : vector<32x128xbf16> to vector<1x32x128xbf16>
    tpu.vector_store %arg5[%c0_8, %c0_9, %c0_10], %17 {strides = array<i32>} : memref<1x32x128xbf16, #tpu.memory_space<vmem>>, vector<1x32x128xbf16>,
    return
  }
  func.func @transform_0(%arg0: i32, %arg1: i32) -> (i32, i32) {
    %c0_i32 = arith.constant 0 : i32
    %c0_i32_0 = arith.constant 0 : i32
    return %arg1, %c0_i32 : i32, i32
  }
  func.func @transform_1(%arg0: i32, %arg1: i32) -> (i32, i32, i32) {
    %c0_i32 = arith.constant 0 : i32
    %c0_i32_0 = arith.constant 0 : i32
    %c0_i32_1 = arith.constant 0 : i32
    return %arg0, %c0_i32, %c0_i32_0 : i32, i32, i32
  }
  func.func @transform_2(%arg0: i32, %arg1: i32) -> (i32, i32, i32) {
    %c0_i32 = arith.constant 0 : i32
    %c0_i32_0 = arith.constant 0 : i32
    %c0_i32_1 = arith.constant 0 : i32
    return %arg0, %c0_i32, %c0_i32_0 : i32, i32, i32
  }
  func.func @transform_3(%arg0: i32, %arg1: i32) -> (i32, i32, i32) {
    %c0_i32 = arith.constant 0 : i32
    %c0_i32_0 = arith.constant 0 : i32
    return %arg0, %arg1, %c0_i32 : i32, i32, i32
  }
}

</mosaic_0001>

<llo_original>
// kernel: _front_forward.1
$region0: #{_front_forward.1}
  #allocation0 [shape = 'u32[]', space=smem, size = 0x4, offset = 0x4, fixed_abs, tag = 'smem constant byte address 0x4 - core index']
  #allocation1 [shape = 'u32[144,128]{1,0:T(1,128)}', space=vmem, size = 0x12000, scoped, tag = 'internal scratch']
  %s0 = inlined_call_operand.vmem [shape: bf16[32,3267], index: 0, kind: input, shape index: {}]
  %s1 = inlined_call_operand.vmem [shape: bf16[1,3267,128], index: 1, kind: input, shape index: {}]
  %s2 = inlined_call_operand.vmem [shape: f32[1,2,128], index: 2, kind: input, shape index: {}]
  %s3 = inlined_call_operand.vmem [shape: bf16[1,32,128], index: 3, kind: output, shape index: {}]
  %s4 = sld [smem:[#allocation0]]
  $region22: #{_front_forward.1} parent=0
    _
  %s6 = ssub.s32 1, %s4
  %s7 = scalar_select 0, %s6, %s4
  // Predicated region
  $region2: #{_front_forward.1} parent=0 // pred_check
    _
  $region3: #{_front_forward.1} parent=0 // pred_check_branch
    %9 = sbr.rel (0) target = $region5
  $region4: #{_front_forward.1} parent=0 // pred_region
    _
  $region5: #{_front_forward.1} parent=0 // pred_fallthru
    _
  // Predicated region
  $region6: #{_front_forward.1} parent=0 // pred_check
    _
  $region7: #{_front_forward.1} parent=0 // pred_check_branch
    %11 = sbr.rel (0) target = $region9
  $region8: #{_front_forward.1} parent=0 // pred_region
    _
  $region9: #{_front_forward.1} parent=0 // pred_fallthru
    _
  // Predicated region
  $region10: #{_front_forward.1} parent=0 // pred_check
    _
  $region11: #{_front_forward.1} parent=0 // pred_check_branch
    %13 = sbr.rel (0) target = $region13
  $region12: #{_front_forward.1} parent=0 // pred_region
    _
  $region13: #{_front_forward.1} parent=0 // pred_fallthru
    _
  %v15 = vld [vmem:[%s0] sm:$0xff]
  %v16 = vld [vmem:[%s0 + $0x8] sm:$0xff]
  %v17 = vld [vmem:[%s0 + $0x10] sm:$0xff]
  %v18 = vld [vmem:[%s0 + $0x18] sm:$0xff]
  %v19 = vld [vmem:[%s0 + $0x20] sm:$0xff]
  %v20 = vld [vmem:[%s0 + $0x28] sm:$0xff]
  %v21 = vld [vmem:[%s0 + $0x30] sm:$0xff]
  %v22 = vld [vmem:[%s0 + $0x38] sm:$0xff]
  %v23 = vld [vmem:[%s0 + $0x40] sm:$0xff]
  %v24 = vld [vmem:[%s0 + $0x48] sm:$0xff]
  %v25 = vld [vmem:[%s0 + $0x50] sm:$0xff]
  %v26 = vld [vmem:[%s0 + $0x58] sm:$0xff]
  %v27 = vld [vmem:[%s0 + $0x60] sm:$0xff]
  %v28 = vld [vmem:[%s0 + $0x68] sm:$0xff]
  %v29 = vld [vmem:[%s0 + $0x70] sm:$0xff]
  %v30 = vld [vmem:[%s0 + $0x78] sm:$0xff]
  %v31 = vld [vmem:[%s0 + $0x80] sm:$0xff]
  %v32 = vld [vmem:[%s0 + $0x88] sm:$0xff]
  %v33 = vld [vmem:[%s0 + $0x90] sm:$0xff]
  %v34 = vld [vmem:[%s0 + $0x98] sm:$0xff]
  %v35 = vld [vmem:[%s0 + $0xa0] sm:$0xff]
  %v36 = vld [vmem:[%s0 + $0xa8] sm:$0xff]
  %v37 = vld [vmem:[%s0 + $0xb0] sm:$0xff]
  %v38 = vld [vmem:[%s0 + $0xb8] sm:$0xff]
  %v39 = vld [vmem:[%s0 + $0xc0] sm:$0xff]
  %v40 = vld [vmem:[%s0 + $0xc8] sm:$0xff]
  %v41 = vld [vmem:[%s0 + $0xd0] sm:$0xff]
  %v42 = vld [vmem:[%s0 + $0xd8] sm:$0xff]
  %v43 = vld [vmem:[%s0 + $0xe0] sm:$0xff]
  %v44 = vld [vmem:[%s0 + $0xe8] sm:$0xff]
  %v45 = vld [vmem:[%s0 + $0xf0] sm:$0xff]
  %v46 = vld [vmem:[%s0 + $0xf8] sm:$0xff]
  %v47 = vld [vmem:[%s0 + $0x100] sm:$0xff]
  %v48 = vld [vmem:[%s0 + $0x108] sm:$0xff]
  %v49 = vld [vmem:[%s0 + $0x110] sm:$0xff]
  %v50 = vld [vmem:[%s0 + $0x118] sm:$0xff]
  %v51 = vld [vmem:[%s0 + $0x120] sm:$0xff]
  %v52 = vld [vmem:[%s0 + $0x128] sm:$0xff]
  %v53 = vld [vmem:[%s0 + $0x130] sm:$0xff]
  %v54 = vld [vmem:[%s0 + $0x138] sm:$0xff]
  %v55 = vld [vmem:[%s0 + $0x140] sm:$0xff]
  %v56 = vld [vmem:[%s0 + $0x148] sm:$0xff]
  %v57 = vld [vmem:[%s0 + $0x150] sm:$0xff]
  %v58 = vld [vmem:[%s0 + $0x158] sm:$0xff]
  %v59 = vld [vmem:[%s0 + $0x160] sm:$0xff]
  %v60 = vld [vmem:[%s0 + $0x168] sm:$0xff]
  %v61 = vld [vmem:[%s0 + $0x170] sm:$0xff]
  %v62 = vld [vmem:[%s0 + $0x178] sm:$0xff]
  %v63 = vld [vmem:[%s0 + $0x180] sm:$0xff]
  %v64 = vld [vmem:[%s0 + $0x188] sm:$0xff]
  %v65 = vld [vmem:[%s0 + $0x190] sm:$0xff]
  %v66 = vld [vmem:[%s0 + $0x198] sm:$0xff]
  %v67 = vld [vmem:[%s1] sm:$0xf]
  %v68 = vld [vmem:[%s1 + $0x4] sm:$0xf]
  %v69 = vld [vmem:[%s1 + $0x8] sm:$0xf]
  %v70 = vld [vmem:[%s1 + $0xc] sm:$0xf]
  %v71 = vld [vmem:[%s1 + $0x10] sm:$0xf]
  %v72 = vld [vmem:[%s1 + $0x14] sm:$0xf]
  %v73 = vld [vmem:[%s1 + $0x18] sm:$0xf]
  %v74 = vld [vmem:[%s1 + $0x1c] sm:$0xf]
  %v75 = vld [vmem:[%s1 + $0x20] sm:$0xf]
  %v76 = vld [vmem:[%s1 + $0x24] sm:$0xf]
  %v77 = vld [vmem:[%s1 + $0x28] sm:$0xf]
  %v78 = vld [vmem:[%s1 + $0x2c] sm:$0xf]
  %v79 = vld [vmem:[%s1 + $0x30] sm:$0xf]
  %v80 = vld [vmem:[%s1 + $0x34] sm:$0xf]
  %v81 = vld [vmem:[%s1 + $0x38] sm:$0xf]
  %v82 = vld [vmem:[%s1 + $0x3c] sm:$0xf]
  %v83 = vld [vmem:[%s1 + $0x40] sm:$0xf]
  %v84 = vld [vmem:[%s1 + $0x44] sm:$0xf]
  %v85 = vld [vmem:[%s1 + $0x48] sm:$0xf]
  %v86 = vld [vmem:[%s1 + $0x4c] sm:$0xf]
  %v87 = vld [vmem:[%s1 + $0x50] sm:$0xf]
  %v88 = vld [vmem:[%s1 + $0x54] sm:$0xf]
  %v89 = vld [vmem:[%s1 + $0x58] sm:$0xf]
  %v90 = vld [vmem:[%s1 + $0x5c] sm:$0xf]
  %v91 = vld [vmem:[%s1 + $0x60] sm:$0xf]
  %v92 = vld [vmem:[%s1 + $0x64] sm:$0xf]
  %v93 = vld [vmem:[%s1 + $0x68] sm:$0xf]
  %v94 = vld [vmem:[%s1 + $0x6c] sm:$0xf]
  %v95 = vld [vmem:[%s1 + $0x70] sm:$0xf]
  %v96 = vld [vmem:[%s1 + $0x74] sm:$0xf]
  %v97 = vld [vmem:[%s1 + $0x78] sm:$0xf]
  %v98 = vld [vmem:[%s1 + $0x7c] sm:$0xf]
  %v99 = vld [vmem:[%s1 + $0x80] sm:$0xf]
  %v100 = vld [vmem:[%s1 + $0x84] sm:$0xf]
  %v101 = vld [vmem:[%s1 + $0x88] sm:$0xf]
  %v102 = vld [vmem:[%s1 + $0x8c] sm:$0xf]
  %v103 = vld [vmem:[%s1 + $0x90] sm:$0xf]
  %v104 = vld [vmem:[%s1 + $0x94] sm:$0xf]
  %v105 = vld [vmem:[%s1 + $0x98] sm:$0xf]
  %v106 = vld [vmem:[%s1 + $0x9c] sm:$0xf]
  %v107 = vld [vmem:[%s1 + $0xa0] sm:$0xf]
  %v108 = vld [vmem:[%s1 + $0xa4] sm:$0xf]
  %v109 = vld [vmem:[%s1 + $0xa8] sm:$0xf]
  %v110 = vld [vmem:[%s1 + $0xac] sm:$0xf]
  %v111 = vld [vmem:[%s1 + $0xb0] sm:$0xf]
  %v112 = vld [vmem:[%s1 + $0xb4] sm:$0xf]
  %v113 = vld [vmem:[%s1 + $0xb8] sm:$0xf]
  %v114 = vld [vmem:[%s1 + $0xbc] sm:$0xf]
  %v115 = vld [vmem:[%s1 + $0xc0] sm:$0xf]
  %v116 = vld [vmem:[%s1 + $0xc4] sm:$0xf]
  %v117 = vld [vmem:[%s1 + $0xc8] sm:$0xf]
  %v118 = vld [vmem:[%s1 + $0xcc] sm:$0xf]
  %v119 = vld [vmem:[%s1 + $0xd0] sm:$0xf]
  %v120 = vld [vmem:[%s1 + $0xd4] sm:$0xf]
  %v121 = vld [vmem:[%s1 + $0xd8] sm:$0xf]
  %v122 = vld [vmem:[%s1 + $0xdc] sm:$0xf]
  %v123 = vld [vmem:[%s1 + $0xe0] sm:$0xf]
  %v124 = vld [vmem:[%s1 + $0xe4] sm:$0xf]
  %v125 = vld [vmem:[%s1 + $0xe8] sm:$0xf]
  %v126 = vld [vmem:[%s1 + $0xec] sm:$0xf]
  %v127 = vld [vmem:[%s1 + $0xf0] sm:$0xf]
  %v128 = vld [vmem:[%s1 + $0xf4] sm:$0xf]
  %v129 = vld [vmem:[%s1 + $0xf8] sm:$0xf]
  %v130 = vld [vmem:[%s1 + $0xfc] sm:$0xf]
  %v131 = vld [vmem:[%s1 + $0x100] sm:$0xf]
  %v132 = vld [vmem:[%s1 + $0x104] sm:$0xf]
  %v133 = vld [vmem:[%s1 + $0x108] sm:$0xf]
  %v134 = vld [vmem:[%s1 + $0x10c] sm:$0xf]
  %v135 = vld [vmem:[%s1 + $0x110] sm:$0xf]
  %v136 = vld [vmem:[%s1 + $0x114] sm:$0xf]
  %v137 = vld [vmem:[%s1 + $0x118] sm:$0xf]
  %v138 = vld [vmem:[%s1 + $0x11c] sm:$0xf]
  %v139 = vld [vmem:[%s1 + $0x120] sm:$0xf]
  %v140 = vld [vmem:[%s1 + $0x124] sm:$0xf]
  %v141 = vld [vmem:[%s1 + $0x128] sm:$0xf]
  %v142 = vld [vmem:[%s1 + $0x12c] sm:$0xf]
  %v143 = vld [vmem:[%s1 + $0x130] sm:$0xf]
  %v144 = vld [vmem:[%s1 + $0x134] sm:$0xf]
  %v145 = vld [vmem:[%s1 + $0x138] sm:$0xf]
  %v146 = vld [vmem:[%s1 + $0x13c] sm:$0xf]
  %v147 = vld [vmem:[%s1 + $0x140] sm:$0xf]
  %v148 = vld [vmem:[%s1 + $0x144] sm:$0xf]
  %v149 = vld [vmem:[%s1 + $0x148] sm:$0xf]
  %v150 = vld [vmem:[%s1 + $0x14c] sm:$0xf]
  %v151 = vld [vmem:[%s1 + $0x150] sm:$0xf]
  %v152 = vld [vmem:[%s1 + $0x154] sm:$0xf]
  %v153 = vld [vmem:[%s1 + $0x158] sm:$0xf]
  %v154 = vld [vmem:[%s1 + $0x15c] sm:$0xf]
  %v155 = vld [vmem:[%s1 + $0x160] sm:$0xf]
  %v156 = vld [vmem:[%s1 + $0x164] sm:$0xf]
  %v157 = vld [vmem:[%s1 + $0x168] sm:$0xf]
  %v158 = vld [vmem:[%s1 + $0x16c] sm:$0xf]
  %v159 = vld [vmem:[%s1 + $0x170] sm:$0xf]
  %v160 = vld [vmem:[%s1 + $0x174] sm:$0xf]
  %v161 = vld [vmem:[%s1 + $0x178] sm:$0xf]
  %v162 = vld [vmem:[%s1 + $0x17c] sm:$0xf]
  %v163 = vld [vmem:[%s1 + $0x180] sm:$0xf]
  %v164 = vld [vmem:[%s1 + $0x184] sm:$0xf]
  %v165 = vld [vmem:[%s1 + $0x188] sm:$0xf]
  %v166 = vld [vmem:[%s1 + $0x18c] sm:$0xf]
  %v167 = vld [vmem:[%s1 + $0x190] sm:$0xf]
  %v168 = vld [vmem:[%s1 + $0x194] sm:$0xf]
  %v169 = vld [vmem:[%s1 + $0x198] sm:$0xf]
  %v170 = vld [vmem:[%s1 + $0x19c] sm:$0xf]
  %v171 = vld [vmem:[%s1 + $0x1a0] sm:$0xf]
  %v172 = vld [vmem:[%s1 + $0x1a4] sm:$0xf]
  %v173 = vld [vmem:[%s1 + $0x1a8] sm:$0xf]
  %v174 = vld [vmem:[%s1 + $0x1ac] sm:$0xf]
  %v175 = vld [vmem:[%s1 + $0x1b0] sm:$0xf]
  %v176 = vld [vmem:[%s1 + $0x1b4] sm:$0xf]
  %v177 = vld [vmem:[%s1 + $0x1b8] sm:$0xf]
  %v178 = vld [vmem:[%s1 + $0x1bc] sm:$0xf]
  %v179 = vld [vmem:[%s1 + $0x1c0] sm:$0xf]
  %v180 = vld [vmem:[%s1 + $0x1c4] sm:$0xf]
  %v181 = vld [vmem:[%s1 + $0x1c8] sm:$0xf]
  %v182 = vld [vmem:[%s1 + $0x1cc] sm:$0xf]
  %v183 = vld [vmem:[%s1 + $0x1d0] sm:$0xf]
  %v184 = vld [vmem:[%s1 + $0x1d4] sm:$0xf]
  %v185 = vld [vmem:[%s1 + $0x1d8] sm:$0xf]
  %v186 = vld [vmem:[%s1 + $0x1dc] sm:$0xf]
  %v187 = vld [vmem:[%s1 + $0x1e0] sm:$0xf]
  %v188 = vld [vmem:[%s1 + $0x1e4] sm:$0xf]
  %v189 = vld [vmem:[%s1 + $0x1e8] sm:$0xf]
  %v190 = vld [vmem:[%s1 + $0x1ec] sm:$0xf]
  %v191 = vld [vmem:[%s1 + $0x1f0] sm:$0xf]
  %v192 = vld [vmem:[%s1 + $0x1f4] sm:$0xf]
  %v193 = vld [vmem:[%s1 + $0x1f8] sm:$0xf]
  %v194 = vld [vmem:[%s1 + $0x1fc] sm:$0xf]
  %v195 = vld [vmem:[%s1 + $0x200] sm:$0xf]
  %v196 = vld [vmem:[%s1 + $0x204] sm:$0xf]
  %v197 = vld [vmem:[%s1 + $0x208] sm:$0xf]
  %v198 = vld [vmem:[%s1 + $0x20c] sm:$0xf]
  %v199 = vld [vmem:[%s1 + $0x210] sm:$0xf]
  %v200 = vld [vmem:[%s1 + $0x214] sm:$0xf]
  %v201 = vld [vmem:[%s1 + $0x218] sm:$0xf]
  %v202 = vld [vmem:[%s1 + $0x21c] sm:$0xf]
  %v203 = vld [vmem:[%s1 + $0x220] sm:$0xf]
  %v204 = vld [vmem:[%s1 + $0x224] sm:$0xf]
  %v205 = vld [vmem:[%s1 + $0x228] sm:$0xf]
  %v206 = vld [vmem:[%s1 + $0x22c] sm:$0xf]
  %v207 = vld [vmem:[%s1 + $0x230] sm:$0xf]
  %v208 = vld [vmem:[%s1 + $0x234] sm:$0xf]
  %v209 = vld [vmem:[%s1 + $0x238] sm:$0xf]
  %v210 = vld [vmem:[%s1 + $0x23c] sm:$0xf]
  %v211 = vld [vmem:[%s1 + $0x240] sm:$0xf]
  %v212 = vld [vmem:[%s1 + $0x244] sm:$0xf]
  %v213 = vld [vmem:[%s1 + $0x248] sm:$0xf]
  %v214 = vld [vmem:[%s1 + $0x24c] sm:$0xf]
  %v215 = vld [vmem:[%s1 + $0x250] sm:$0xf]
  %v216 = vld [vmem:[%s1 + $0x254] sm:$0xf]
  %v217 = vld [vmem:[%s1 + $0x258] sm:$0xf]
  %v218 = vld [vmem:[%s1 + $0x25c] sm:$0xf]
  %v219 = vld [vmem:[%s1 + $0x260] sm:$0xf]
  %v220 = vld [vmem:[%s1 + $0x264] sm:$0xf]
  %v221 = vld [vmem:[%s1 + $0x268] sm:$0xf]
  %v222 = vld [vmem:[%s1 + $0x26c] sm:$0xf]
  %v223 = vld [vmem:[%s1 + $0x270] sm:$0xf]
  %v224 = vld [vmem:[%s1 + $0x274] sm:$0xf]
  %v225 = vld [vmem:[%s1 + $0x278] sm:$0xf]
  %v226 = vld [vmem:[%s1 + $0x27c] sm:$0xf]
  %v227 = vld [vmem:[%s1 + $0x280] sm:$0xf]
  %v228 = vld [vmem:[%s1 + $0x284] sm:$0xf]
  %v229 = vld [vmem:[%s1 + $0x288] sm:$0xf]
  %v230 = vld [vmem:[%s1 + $0x28c] sm:$0xf]
  %v231 = vld [vmem:[%s1 + $0x290] sm:$0xf]
  %v232 = vld [vmem:[%s1 + $0x294] sm:$0xf]
  %v233 = vld [vmem:[%s1 + $0x298] sm:$0xf]
  %v234 = vld [vmem:[%s1 + $0x29c] sm:$0xf]
  %v235 = vld [vmem:[%s1 + $0x2a0] sm:$0xf]
  %v236 = vld [vmem:[%s1 + $0x2a4] sm:$0xf]
  %v237 = vld [vmem:[%s1 + $0x2a8] sm:$0xf]
  %v238 = vld [vmem:[%s1 + $0x2ac] sm:$0xf]
  %v239 = vld [vmem:[%s1 + $0x2b0] sm:$0xf]
  %v240 = vld [vmem:[%s1 + $0x2b4] sm:$0xf]
  %v241 = vld [vmem:[%s1 + $0x2b8] sm:$0xf]
  %v242 = vld [vmem:[%s1 + $0x2bc] sm:$0xf]
  %v243 = vld [vmem:[%s1 + $0x2c0] sm:$0xf]
  %v244 = vld [vmem:[%s1 + $0x2c4] sm:$0xf]
  %v245 = vld [vmem:[%s1 + $0x2c8] sm:$0xf]
  %v246 = vld [vmem:[%s1 + $0x2cc] sm:$0xf]
  %v247 = vld [vmem:[%s1 + $0x2d0] sm:$0xf]
  %v248 = vld [vmem:[%s1 + $0x2d4] sm:$0xf]
  %v249 = vld [vmem:[%s1 + $0x2d8] sm:$0xf]
  %v250 = vld [vmem:[%s1 + $0x2dc] sm:$0xf]
  %v251 = vld [vmem:[%s1 + $0x2e0] sm:$0xf]
  %v252 = vld [vmem:[%s1 + $0x2e4] sm:$0xf]
  %v253 = vld [vmem:[%s1 + $0x2e8] sm:$0xf]
  %v254 = vld [vmem:[%s1 + $0x2ec] sm:$0xf]
  %v255 = vld [vmem:[%s1 + $0x2f0] sm:$0xf]
  %v256 = vld [vmem:[%s1 + $0x2f4] sm:$0xf]
  %v257 = vld [vmem:[%s1 + $0x2f8] sm:$0xf]
  %v258 = vld [vmem:[%s1 + $0x2fc] sm:$0xf]
  %v259 = vld [vmem:[%s1 + $0x300] sm:$0xf]
  %v260 = vld [vmem:[%s1 + $0x304] sm:$0xf]
  %v261 = vld [vmem:[%s1 + $0x308] sm:$0xf]
  %v262 = vld [vmem:[%s1 + $0x30c] sm:$0xf]
  %v263 = vld [vmem:[%s1 + $0x310] sm:$0xf]
  %v264 = vld [vmem:[%s1 + $0x314] sm:$0xf]
  %v265 = vld [vmem:[%s1 + $0x318] sm:$0xf]
  %v266 = vld [vmem:[%s1 + $0x31c] sm:$0xf]
  %v267 = vld [vmem:[%s1 + $0x320] sm:$0xf]
  %v268 = vld [vmem:[%s1 + $0x324] sm:$0xf]
  %v269 = vld [vmem:[%s1 + $0x328] sm:$0xf]
  %v270 = vld [vmem:[%s1 + $0x32c] sm:$0xf]
  %v271 = vld [vmem:[%s1 + $0x330] sm:$0xf]
  %v272 = vld [vmem:[%s1 + $0x334] sm:$0xf]
  %v273 = vld [vmem:[%s1 + $0x338] sm:$0xf]
  %v274 = vld [vmem:[%s1 + $0x33c] sm:$0xf]
  %v275 = vld [vmem:[%s1 + $0x340] sm:$0xf]
  %v276 = vld [vmem:[%s1 + $0x344] sm:$0xf]
  %v277 = vld [vmem:[%s1 + $0x348] sm:$0xf]
  %v278 = vld [vmem:[%s1 + $0x34c] sm:$0xf]
  %v279 = vld [vmem:[%s1 + $0x350] sm:$0xf]
  %v280 = vld [vmem:[%s1 + $0x354] sm:$0xf]
  %v281 = vld [vmem:[%s1 + $0x358] sm:$0xf]
  %v282 = vld [vmem:[%s1 + $0x35c] sm:$0xf]
  %v283 = vld [vmem:[%s1 + $0x360] sm:$0xf]
  %v284 = vld [vmem:[%s1 + $0x364] sm:$0xf]
  %v285 = vld [vmem:[%s1 + $0x368] sm:$0xf]
  %v286 = vld [vmem:[%s1 + $0x36c] sm:$0xf]
  %v287 = vld [vmem:[%s1 + $0x370] sm:$0xf]
  %v288 = vld [vmem:[%s1 + $0x374] sm:$0xf]
  %v289 = vld [vmem:[%s1 + $0x378] sm:$0xf]
  %v290 = vld [vmem:[%s1 + $0x37c] sm:$0xf]
  %v291 = vld [vmem:[%s1 + $0x380] sm:$0xf]
  %v292 = vld [vmem:[%s1 + $0x384] sm:$0xf]
  %v293 = vld [vmem:[%s1 + $0x388] sm:$0xf]
  %v294 = vld [vmem:[%s1 + $0x38c] sm:$0xf]
  %v295 = vld [vmem:[%s1 + $0x390] sm:$0xf]
  %v296 = vld [vmem:[%s1 + $0x394] sm:$0xf]
  %v297 = vld [vmem:[%s1 + $0x398] sm:$0xf]
  %v298 = vld [vmem:[%s1 + $0x39c] sm:$0xf]
  %v299 = vld [vmem:[%s1 + $0x3a0] sm:$0xf]
  %v300 = vld [vmem:[%s1 + $0x3a4] sm:$0xf]
  %v301 = vld [vmem:[%s1 + $0x3a8] sm:$0xf]
  %v302 = vld [vmem:[%s1 + $0x3ac] sm:$0xf]
  %v303 = vld [vmem:[%s1 + $0x3b0] sm:$0xf]
  %v304 = vld [vmem:[%s1 + $0x3b4] sm:$0xf]
  %v305 = vld [vmem:[%s1 + $0x3b8] sm:$0xf]
  %v306 = vld [vmem:[%s1 + $0x3bc] sm:$0xf]
  %v307 = vld [vmem:[%s1 + $0x3c0] sm:$0xf]
  %v308 = vld [vmem:[%s1 + $0x3c4] sm:$0xf]
  %v309 = vld [vmem:[%s1 + $0x3c8] sm:$0xf]
  %v310 = vld [vmem:[%s1 + $0x3cc] sm:$0xf]
  %v311 = vld [vmem:[%s1 + $0x3d0] sm:$0xf]
  %v312 = vld [vmem:[%s1 + $0x3d4] sm:$0xf]
  %v313 = vld [vmem:[%s1 + $0x3d8] sm:$0xf]
  %v314 = vld [vmem:[%s1 + $0x3dc] sm:$0xf]
  %v315 = vld [vmem:[%s1 + $0x3e0] sm:$0xf]
  %v316 = vld [vmem:[%s1 + $0x3e4] sm:$0xf]
  %v317 = vld [vmem:[%s1 + $0x3e8] sm:$0xf]
  %v318 = vld [vmem:[%s1 + $0x3ec] sm:$0xf]
  %v319 = vld [vmem:[%s1 + $0x3f0] sm:$0xf]
  %v320 = vld [vmem:[%s1 + $0x3f4] sm:$0xf]
  %v321 = vld [vmem:[%s1 + $0x3f8] sm:$0xf]
  %v322 = vld [vmem:[%s1 + $0x3fc] sm:$0xf]
  %v323 = vld [vmem:[%s1 + $0x400] sm:$0xf]
  %v324 = vld [vmem:[%s1 + $0x404] sm:$0xf]
  %v325 = vld [vmem:[%s1 + $0x408] sm:$0xf]
  %v326 = vld [vmem:[%s1 + $0x40c] sm:$0xf]
  %v327 = vld [vmem:[%s1 + $0x410] sm:$0xf]
  %v328 = vld [vmem:[%s1 + $0x414] sm:$0xf]
  %v329 = vld [vmem:[%s1 + $0x418] sm:$0xf]
  %v330 = vld [vmem:[%s1 + $0x41c] sm:$0xf]
  %v331 = vld [vmem:[%s1 + $0x420] sm:$0xf]
  %v332 = vld [vmem:[%s1 + $0x424] sm:$0xf]
  %v333 = vld [vmem:[%s1 + $0x428] sm:$0xf]
  %v334 = vld [vmem:[%s1 + $0x42c] sm:$0xf]
  %v335 = vld [vmem:[%s1 + $0x430] sm:$0xf]
  %v336 = vld [vmem:[%s1 + $0x434] sm:$0xf]
  %v337 = vld [vmem:[%s1 + $0x438] sm:$0xf]
  %v338 = vld [vmem:[%s1 + $0x43c] sm:$0xf]
  %v339 = vld [vmem:[%s1 + $0x440] sm:$0xf]
  %v340 = vld [vmem:[%s1 + $0x444] sm:$0xf]
  %v341 = vld [vmem:[%s1 + $0x448] sm:$0xf]
  %v342 = vld [vmem:[%s1 + $0x44c] sm:$0xf]
  %v343 = vld [vmem:[%s1 + $0x450] sm:$0xf]
  %v344 = vld [vmem:[%s1 + $0x454] sm:$0xf]
  %v345 = vld [vmem:[%s1 + $0x458] sm:$0xf]
  %v346 = vld [vmem:[%s1 + $0x45c] sm:$0xf]
  %v347 = vld [vmem:[%s1 + $0x460] sm:$0xf]
  %v348 = vld [vmem:[%s1 + $0x464] sm:$0xf]
  %v349 = vld [vmem:[%s1 + $0x468] sm:$0xf]
  %v350 = vld [vmem:[%s1 + $0x46c] sm:$0xf]
  %v351 = vld [vmem:[%s1 + $0x470] sm:$0xf]
  %v352 = vld [vmem:[%s1 + $0x474] sm:$0xf]
  %v353 = vld [vmem:[%s1 + $0x478] sm:$0xf]
  %v354 = vld [vmem:[%s1 + $0x47c] sm:$0xf]
  %v355 = vld [vmem:[%s1 + $0x480] sm:$0xf]
  %v356 = vld [vmem:[%s1 + $0x484] sm:$0xf]
  %v357 = vld [vmem:[%s1 + $0x488] sm:$0xf]
  %v358 = vld [vmem:[%s1 + $0x48c] sm:$0xf]
  %v359 = vld [vmem:[%s1 + $0x490] sm:$0xf]
  %v360 = vld [vmem:[%s1 + $0x494] sm:$0xf]
  %v361 = vld [vmem:[%s1 + $0x498] sm:$0xf]
  %v362 = vld [vmem:[%s1 + $0x49c] sm:$0xf]
  %v363 = vld [vmem:[%s1 + $0x4a0] sm:$0xf]
  %v364 = vld [vmem:[%s1 + $0x4a4] sm:$0xf]
  %v365 = vld [vmem:[%s1 + $0x4a8] sm:$0xf]
  %v366 = vld [vmem:[%s1 + $0x4ac] sm:$0xf]
  %v367 = vld [vmem:[%s1 + $0x4b0] sm:$0xf]
  %v368 = vld [vmem:[%s1 + $0x4b4] sm:$0xf]
  %v369 = vld [vmem:[%s1 + $0x4b8] sm:$0xf]
  %v370 = vld [vmem:[%s1 + $0x4bc] sm:$0xf]
  %v371 = vld [vmem:[%s1 + $0x4c0] sm:$0xf]
  %v372 = vld [vmem:[%s1 + $0x4c4] sm:$0xf]
  %v373 = vld [vmem:[%s1 + $0x4c8] sm:$0xf]
  %v374 = vld [vmem:[%s1 + $0x4cc] sm:$0xf]
  %v375 = vld [vmem:[%s1 + $0x4d0] sm:$0xf]
  %v376 = vld [vmem:[%s1 + $0x4d4] sm:$0xf]
  %v377 = vld [vmem:[%s1 + $0x4d8] sm:$0xf]
  %v378 = vld [vmem:[%s1 + $0x4dc] sm:$0xf]
  %v379 = vld [vmem:[%s1 + $0x4e0] sm:$0xf]
  %v380 = vld [vmem:[%s1 + $0x4e4] sm:$0xf]
  %v381 = vld [vmem:[%s1 + $0x4e8] sm:$0xf]
  %v382 = vld [vmem:[%s1 + $0x4ec] sm:$0xf]
  %v383 = vld [vmem:[%s1 + $0x4f0] sm:$0xf]
  %v384 = vld [vmem:[%s1 + $0x4f4] sm:$0xf]
  %v385 = vld [vmem:[%s1 + $0x4f8] sm:$0xf]
  %v386 = vld [vmem:[%s1 + $0x4fc] sm:$0xf]
  %v387 = vld [vmem:[%s1 + $0x500] sm:$0xf]
  %v388 = vld [vmem:[%s1 + $0x504] sm:$0xf]
  %v389 = vld [vmem:[%s1 + $0x508] sm:$0xf]
  %v390 = vld [vmem:[%s1 + $0x50c] sm:$0xf]
  %v391 = vld [vmem:[%s1 + $0x510] sm:$0xf]
  %v392 = vld [vmem:[%s1 + $0x514] sm:$0xf]
  %v393 = vld [vmem:[%s1 + $0x518] sm:$0xf]
  %v394 = vld [vmem:[%s1 + $0x51c] sm:$0xf]
  %v395 = vld [vmem:[%s1 + $0x520] sm:$0xf]
  %v396 = vld [vmem:[%s1 + $0x524] sm:$0xf]
  %v397 = vld [vmem:[%s1 + $0x528] sm:$0xf]
  %v398 = vld [vmem:[%s1 + $0x52c] sm:$0xf]
  %v399 = vld [vmem:[%s1 + $0x530] sm:$0xf]
  %v400 = vld [vmem:[%s1 + $0x534] sm:$0xf]
  %v401 = vld [vmem:[%s1 + $0x538] sm:$0xf]
  %v402 = vld [vmem:[%s1 + $0x53c] sm:$0xf]
  %v403 = vld [vmem:[%s1 + $0x540] sm:$0xf]
  %v404 = vld [vmem:[%s1 + $0x544] sm:$0xf]
  %v405 = vld [vmem:[%s1 + $0x548] sm:$0xf]
  %v406 = vld [vmem:[%s1 + $0x54c] sm:$0xf]
  %v407 = vld [vmem:[%s1 + $0x550] sm:$0xf]
  %v408 = vld [vmem:[%s1 + $0x554] sm:$0xf]
  %v409 = vld [vmem:[%s1 + $0x558] sm:$0xf]
  %v410 = vld [vmem:[%s1 + $0x55c] sm:$0xf]
  %v411 = vld [vmem:[%s1 + $0x560] sm:$0xf]
  %v412 = vld [vmem:[%s1 + $0x564] sm:$0xf]
  %v413 = vld [vmem:[%s1 + $0x568] sm:$0xf]
  %v414 = vld [vmem:[%s1 + $0x56c] sm:$0xf]
  %v415 = vld [vmem:[%s1 + $0x570] sm:$0xf]
  %v416 = vld [vmem:[%s1 + $0x574] sm:$0xf]
  %v417 = vld [vmem:[%s1 + $0x578] sm:$0xf]
  %v418 = vld [vmem:[%s1 + $0x57c] sm:$0xf]
  %v419 = vld [vmem:[%s1 + $0x580] sm:$0xf]
  %v420 = vld [vmem:[%s1 + $0x584] sm:$0xf]
  %v421 = vld [vmem:[%s1 + $0x588] sm:$0xf]
  %v422 = vld [vmem:[%s1 + $0x58c] sm:$0xf]
  %v423 = vld [vmem:[%s1 + $0x590] sm:$0xf]
  %v424 = vld [vmem:[%s1 + $0x594] sm:$0xf]
  %v425 = vld [vmem:[%s1 + $0x598] sm:$0xf]
  %v426 = vld [vmem:[%s1 + $0x59c] sm:$0xf]
  %v427 = vld [vmem:[%s1 + $0x5a0] sm:$0xf]
  %v428 = vld [vmem:[%s1 + $0x5a4] sm:$0xf]
  %v429 = vld [vmem:[%s1 + $0x5a8] sm:$0xf]
  %v430 = vld [vmem:[%s1 + $0x5ac] sm:$0xf]
  %v431 = vld [vmem:[%s1 + $0x5b0] sm:$0xf]
  %v432 = vld [vmem:[%s1 + $0x5b4] sm:$0xf]
  %v433 = vld [vmem:[%s1 + $0x5b8] sm:$0xf]
  %v434 = vld [vmem:[%s1 + $0x5bc] sm:$0xf]
  %v435 = vld [vmem:[%s1 + $0x5c0] sm:$0xf]
  %v436 = vld [vmem:[%s1 + $0x5c4] sm:$0xf]
  %v437 = vld [vmem:[%s1 + $0x5c8] sm:$0xf]
  %v438 = vld [vmem:[%s1 + $0x5cc] sm:$0xf]
  %v439 = vld [vmem:[%s1 + $0x5d0] sm:$0xf]
  %v440 = vld [vmem:[%s1 + $0x5d4] sm:$0xf]
  %v441 = vld [vmem:[%s1 + $0x5d8] sm:$0xf]
  %v442 = vld [vmem:[%s1 + $0x5dc] sm:$0xf]
  %v443 = vld [vmem:[%s1 + $0x5e0] sm:$0xf]
  %v444 = vld [vmem:[%s1 + $0x5e4] sm:$0xf]
  %v445 = vld [vmem:[%s1 + $0x5e8] sm:$0xf]
  %v446 = vld [vmem:[%s1 + $0x5ec] sm:$0xf]
  %v447 = vld [vmem:[%s1 + $0x5f0] sm:$0xf]
  %v448 = vld [vmem:[%s1 + $0x5f4] sm:$0xf]
  %v449 = vld [vmem:[%s1 + $0x5f8] sm:$0xf]
  %v450 = vld [vmem:[%s1 + $0x5fc] sm:$0xf]
  %v451 = vld [vmem:[%s1 + $0x600] sm:$0xf]
  %v452 = vld [vmem:[%s1 + $0x604] sm:$0xf]
  %v453 = vld [vmem:[%s1 + $0x608] sm:$0xf]
  %v454 = vld [vmem:[%s1 + $0x60c] sm:$0xf]
  %v455 = vld [vmem:[%s1 + $0x610] sm:$0xf]
  %v456 = vld [vmem:[%s1 + $0x614] sm:$0xf]
  %v457 = vld [vmem:[%s1 + $0x618] sm:$0xf]
  %v458 = vld [vmem:[%s1 + $0x61c] sm:$0xf]
  %v459 = vld [vmem:[%s1 + $0x620] sm:$0xf]
  %v460 = vld [vmem:[%s1 + $0x624] sm:$0xf]
  %v461 = vld [vmem:[%s1 + $0x628] sm:$0xf]
  %v462 = vld [vmem:[%s1 + $0x62c] sm:$0xf]
  %v463 = vld [vmem:[%s1 + $0x630] sm:$0xf]
  %v464 = vld [vmem:[%s1 + $0x634] sm:$0xf]
  %v465 = vld [vmem:[%s1 + $0x638] sm:$0xf]
  %v466 = vld [vmem:[%s1 + $0x63c] sm:$0xf]
  %v467 = vld [vmem:[%s1 + $0x640] sm:$0xf]
  %v468 = vld [vmem:[%s1 + $0x644] sm:$0xf]
  %v469 = vld [vmem:[%s1 + $0x648] sm:$0xf]
  %v470 = vld [vmem:[%s1 + $0x64c] sm:$0xf]
  %v471 = vld [vmem:[%s1 + $0x650] sm:$0xf]
  %v472 = vld [vmem:[%s1 + $0x654] sm:$0xf]
  %v473 = vld [vmem:[%s1 + $0x658] sm:$0xf]
  %v474 = vld [vmem:[%s1 + $0x65c] sm:$0xf]
  %v475 = vld [vmem:[%s1 + $0x660] sm:$0x3]
  %v528 = vunpack.c.l.b16 %v15
  %v529 = vunpack.c.h.b16 %v15
  %v530 = vunpack.c.l.b16 %v16
  %v531 = vunpack.c.h.b16 %v16
  %v532 = vunpack.c.l.b16 %v17
  %v533 = vunpack.c.h.b16 %v17
  %v534 = vunpack.c.l.b16 %v18
  %v535 = vunpack.c.h.b16 %v18
  %v536 = vunpack.c.l.b16 %v19
  %v537 = vunpack.c.h.b16 %v19
  %v538 = vunpack.c.l.b16 %v20
  %v539 = vunpack.c.h.b16 %v20
  %v540 = vunpack.c.l.b16 %v21
  %v541 = vunpack.c.h.b16 %v21
  %v542 = vunpack.c.l.b16 %v22
  %v543 = vunpack.c.h.b16 %v22
  %v544 = vunpack.c.l.b16 %v23
  %v545 = vunpack.c.h.b16 %v23
  %v546 = vunpack.c.l.b16 %v24
  %v547 = vunpack.c.h.b16 %v24
  %v548 = vunpack.c.l.b16 %v25
  %v549 = vunpack.c.h.b16 %v25
  %v550 = vunpack.c.l.b16 %v26
  %v551 = vunpack.c.h.b16 %v26
  %v552 = vunpack.c.l.b16 %v27
  %v553 = vunpack.c.h.b16 %v27
  %v554 = vunpack.c.l.b16 %v28
  %v555 = vunpack.c.h.b16 %v28
  %v556 = vunpack.c.l.b16 %v29
  %v557 = vunpack.c.h.b16 %v29
  %v558 = vunpack.c.l.b16 %v30
  %v559 = vunpack.c.h.b16 %v30
  %v560 = vunpack.c.l.b16 %v31
  %v561 = vunpack.c.h.b16 %v31
  %v562 = vunpack.c.l.b16 %v32
  %v563 = vunpack.c.h.b16 %v32
  %v564 = vunpack.c.l.b16 %v33
  %v565 = vunpack.c.h.b16 %v33
  %v566 = vunpack.c.l.b16 %v34
  %v567 = vunpack.c.h.b16 %v34
  %v568 = vunpack.c.l.b16 %v35
  %v569 = vunpack.c.h.b16 %v35
  %v570 = vunpack.c.l.b16 %v36
  %v571 = vunpack.c.h.b16 %v36
  %v572 = vunpack.c.l.b16 %v37
  %v573 = vunpack.c.h.b16 %v37
  %v574 = vunpack.c.l.b16 %v38
  %v575 = vunpack.c.h.b16 %v38
  %v576 = vunpack.c.l.b16 %v39
  %v577 = vunpack.c.h.b16 %v39
  %v578 = vunpack.c.l.b16 %v40
  %v579 = vunpack.c.h.b16 %v40
  %v580 = vunpack.c.l.b16 %v41
  %v581 = vunpack.c.h.b16 %v41
  %v582 = vunpack.c.l.b16 %v42
  %v583 = vunpack.c.h.b16 %v42
  %v584 = vunpack.c.l.b16 %v43
  %v585 = vunpack.c.h.b16 %v43
  %v586 = vunpack.c.l.b16 %v44
  %v587 = vunpack.c.h.b16 %v44
  %v588 = vunpack.c.l.b16 %v45
  %v589 = vunpack.c.h.b16 %v45
  %v590 = vunpack.c.l.b16 %v46
  %v591 = vunpack.c.h.b16 %v46
  %v592 = vunpack.c.l.b16 %v47
  %v593 = vunpack.c.h.b16 %v47
  %v594 = vunpack.c.l.b16 %v48
  %v595 = vunpack.c.h.b16 %v48
  %v596 = vunpack.c.l.b16 %v49
  %v597 = vunpack.c.h.b16 %v49
  %v598 = vunpack.c.l.b16 %v50
  %v599 = vunpack.c.h.b16 %v50
  %v600 = vunpack.c.l.b16 %v51
  %v601 = vunpack.c.h.b16 %v51
  %v602 = vunpack.c.l.b16 %v52
  %v603 = vunpack.c.h.b16 %v52
  %v604 = vunpack.c.l.b16 %v53
  %v605 = vunpack.c.h.b16 %v53
  %v606 = vunpack.c.l.b16 %v54
  %v607 = vunpack.c.h.b16 %v54
  %v608 = vunpack.c.l.b16 %v55
  %v609 = vunpack.c.h.b16 %v55
  %v610 = vunpack.c.l.b16 %v56
  %v611 = vunpack.c.h.b16 %v56
  %v612 = vunpack.c.l.b16 %v57
  %v613 = vunpack.c.h.b16 %v57
  %v614 = vunpack.c.l.b16 %v58
  %v615 = vunpack.c.h.b16 %v58
  %v616 = vunpack.c.l.b16 %v59
  %v617 = vunpack.c.h.b16 %v59
  %v618 = vunpack.c.l.b16 %v60
  %v619 = vunpack.c.h.b16 %v60
  %v620 = vunpack.c.l.b16 %v61
  %v621 = vunpack.c.h.b16 %v61
  %v622 = vunpack.c.l.b16 %v62
  %v623 = vunpack.c.h.b16 %v62
  %v624 = vunpack.c.l.b16 %v63
  %v625 = vunpack.c.h.b16 %v63
  %v626 = vunpack.c.l.b16 %v64
  %v627 = vunpack.c.h.b16 %v64
  %v628 = vunpack.c.l.b16 %v65
  %v629 = vunpack.c.h.b16 %v65
  %v630 = vunpack.c.l.b16 %v66
  %v631 = vunpack.c.h.b16 %v66
  %v632 = vpack.c.b16 %v554, %v528
  %v633 = vpack.c.b16 %v555, %v529
  %v634 = vpack.c.b16 %v556, %v530
  %v635 = vpack.c.b16 %v557, %v531
  %v636 = vpack.c.b16 %v558, %v532
  %v637 = vpack.c.b16 %v559, %v533
  %v638 = vpack.c.b16 %v560, %v534
  %v639 = vpack.c.b16 %v561, %v535
  %v640 = vpack.c.b16 %v562, %v536
  %v641 = vpack.c.b16 %v563, %v537
  %v642 = vpack.c.b16 %v564, %v538
  %v643 = vpack.c.b16 %v565, %v539
  %v644 = vpack.c.b16 %v566, %v540
  %v645 = vpack.c.b16 %v567, %v541
  %v646 = vpack.c.b16 %v568, %v542
  %v647 = vpack.c.b16 %v569, %v543
  %v648 = vpack.c.b16 %v570, %v544
  %v649 = vpack.c.b16 %v571, %v545
  %v650 = vpack.c.b16 %v572, %v546
  %v651 = vpack.c.b16 %v573, %v547
  %v652 = vpack.c.b16 %v574, %v548
  %v653 = vpack.c.b16 %v575, %v549
  %v654 = vpack.c.b16 %v576, %v550
  %v655 = vpack.c.b16 %v577, %v551
  %v656 = vpack.c.b16 %v578, %v552
  %v657 = vpack.c.b16 %v579, %v553
  %v658 = vpack.c.b16 %v606, %v580
  %v659 = vpack.c.b16 %v607, %v581
  %v660 = vpack.c.b16 %v608, %v582
  %v661 = vpack.c.b16 %v609, %v583
  %v662 = vpack.c.b16 %v610, %v584
  %v663 = vpack.c.b16 %v611, %v585
  %v664 = vpack.c.b16 %v612, %v586
  %v665 = vpack.c.b16 %v613, %v587
  %v666 = vpack.c.b16 %v614, %v588
  %v667 = vpack.c.b16 %v615, %v589
  %v668 = vpack.c.b16 %v616, %v590
  %v669 = vpack.c.b16 %v617, %v591
  %v670 = vpack.c.b16 %v618, %v592
  %v671 = vpack.c.b16 %v619, %v593
  %v672 = vpack.c.b16 %v620, %v594
  %v673 = vpack.c.b16 %v621, %v595
  %v674 = vpack.c.b16 %v622, %v596
  %v675 = vpack.c.b16 %v623, %v597
  %v676 = vpack.c.b16 %v624, %v598
  %v677 = vpack.c.b16 %v625, %v599
  %v678 = vpack.c.b16 %v626, %v600
  %v679 = vpack.c.b16 %v627, %v601
  %v680 = vpack.c.b16 %v628, %v602
  %v681 = vpack.c.b16 %v629, %v603
  %v682 = vpack.c.b16 %v630, %v604
  %v683 = vpack.c.b16 %v631, %v605
  %v1143 = vunpack.c.l.b16 %v67
  %v1144 = vunpack.c.l.b16 %v68
  %v1145 = vunpack.c.l.b16 %v69
  %v1146 = vunpack.c.l.b16 %v70
  %v1147 = vunpack.c.l.b16 %v71
  %v1148 = vunpack.c.l.b16 %v72
  %v1149 = vunpack.c.l.b16 %v73
  %v1150 = vunpack.c.l.b16 %v74
  %v1151 = vunpack.c.l.b16 %v75
  %v1152 = vunpack.c.l.b16 %v76
  %v1153 = vunpack.c.l.b16 %v77
  %v1154 = vunpack.c.l.b16 %v78
  %v1155 = vunpack.c.l.b16 %v79
  %v1156 = vunpack.c.l.b16 %v80
  %v1157 = vunpack.c.l.b16 %v81
  %v1158 = vunpack.c.l.b16 %v82
  %v1159 = vunpack.c.l.b16 %v83
  %v1160 = vunpack.c.l.b16 %v84
  %v1161 = vunpack.c.l.b16 %v85
  %v1162 = vunpack.c.l.b16 %v86
  %v1163 = vunpack.c.l.b16 %v87
  %v1164 = vunpack.c.l.b16 %v88
  %v1165 = vunpack.c.l.b16 %v89
  %v1166 = vunpack.c.l.b16 %v90
  %v1167 = vunpack.c.l.b16 %v91
  %v1168 = vunpack.c.l.b16 %v92
  %v1169 = vunpack.c.l.b16 %v93
  %v1170 = vunpack.c.l.b16 %v94
  %v1171 = vunpack.c.l.b16 %v95
  %v1172 = vunpack.c.l.b16 %v96
  %v1173 = vunpack.c.l.b16 %v97
  %v1174 = vunpack.c.l.b16 %v98
  %v1175 = vunpack.c.l.b16 %v99
  %v1176 = vunpack.c.l.b16 %v100
  %v1177 = vunpack.c.l.b16 %v101
  %v1178 = vunpack.c.l.b16 %v102
  %v1179 = vunpack.c.l.b16 %v103
  %v1180 = vunpack.c.l.b16 %v104
  %v1181 = vunpack.c.l.b16 %v105
  %v1182 = vunpack.c.l.b16 %v106
  %v1183 = vunpack.c.l.b16 %v107
  %v1184 = vunpack.c.l.b16 %v108
  %v1185 = vunpack.c.l.b16 %v109
  %v1186 = vunpack.c.l.b16 %v110
  %v1187 = vunpack.c.l.b16 %v111
  %v1188 = vunpack.c.l.b16 %v112
  %v1189 = vunpack.c.l.b16 %v113
  %v1190 = vunpack.c.l.b16 %v114
  %v1191 = vunpack.c.l.b16 %v115
  %v1192 = vunpack.c.l.b16 %v116
  %v1193 = vunpack.c.l.b16 %v117
  %v1194 = vunpack.c.l.b16 %v118
  %v1195 = vunpack.c.l.b16 %v119
  %v1196 = vunpack.c.l.b16 %v120
  %v1197 = vunpack.c.l.b16 %v121
  %v1198 = vunpack.c.l.b16 %v122
  %v1199 = vunpack.c.l.b16 %v123
  %v1200 = vunpack.c.l.b16 %v124
  %v1201 = vunpack.c.l.b16 %v125
  %v1202 = vunpack.c.l.b16 %v126
  %v1203 = vunpack.c.l.b16 %v127
  %v1204 = vunpack.c.l.b16 %v128
  %v1205 = vunpack.c.l.b16 %v129
  %v1206 = vunpack.c.l.b16 %v130
  %v1207 = vunpack.c.l.b16 %v131
  %v1208 = vunpack.c.l.b16 %v132
  %v1209 = vunpack.c.l.b16 %v133
  %v1210 = vunpack.c.l.b16 %v134
  %v1211 = vunpack.c.l.b16 %v135
  %v1212 = vunpack.c.l.b16 %v136
  %v1213 = vunpack.c.l.b16 %v137
  %v1214 = vunpack.c.l.b16 %v138
  %v1215 = vunpack.c.l.b16 %v139
  %v1216 = vunpack.c.l.b16 %v140
  %v1217 = vunpack.c.l.b16 %v141
  %v1218 = vunpack.c.l.b16 %v142
  %v1219 = vunpack.c.l.b16 %v143
  %v1220 = vunpack.c.l.b16 %v144
  %v1221 = vunpack.c.l.b16 %v145
  %v1222 = vunpack.c.l.b16 %v146
  %v1223 = vunpack.c.l.b16 %v147
  %v1224 = vunpack.c.l.b16 %v148
  %v1225 = vunpack.c.l.b16 %v149
  %v1226 = vunpack.c.l.b16 %v150
  %v1227 = vunpack.c.l.b16 %v151
  %v1228 = vunpack.c.l.b16 %v152
  %v1229 = vunpack.c.l.b16 %v153
  %v1230 = vunpack.c.l.b16 %v154
  %v1231 = vunpack.c.l.b16 %v155
  %v1232 = vunpack.c.l.b16 %v156
  %v1233 = vunpack.c.l.b16 %v157
  %v1234 = vunpack.c.l.b16 %v158
  %v1235 = vunpack.c.l.b16 %v159
  %v1236 = vunpack.c.l.b16 %v160
  %v1237 = vunpack.c.l.b16 %v161
  %v1238 = vunpack.c.l.b16 %v162
  %v1239 = vunpack.c.l.b16 %v163
  %v1240 = vunpack.c.l.b16 %v164
  %v1241 = vunpack.c.l.b16 %v165
  %v1242 = vunpack.c.l.b16 %v166
  %v1243 = vunpack.c.l.b16 %v167
  %v1244 = vunpack.c.l.b16 %v168
  %v1245 = vunpack.c.l.b16 %v169
  %v1246 = vunpack.c.l.b16 %v170
  %v1247 = vunpack.c.l.b16 %v171
  %v1248 = vunpack.c.l.b16 %v172
  %v1249 = vunpack.c.l.b16 %v173
  %v1250 = vunpack.c.l.b16 %v174
  %v1251 = vunpack.c.l.b16 %v175
  %v1252 = vunpack.c.l.b16 %v176
  %v1253 = vunpack.c.l.b16 %v177
  %v1254 = vunpack.c.l.b16 %v178
  %v1255 = vunpack.c.l.b16 %v179
  %v1256 = vunpack.c.l.b16 %v180
  %v1257 = vunpack.c.l.b16 %v181
  %v1258 = vunpack.c.l.b16 %v182
  %v1259 = vunpack.c.l.b16 %v183
  %v1260 = vunpack.c.l.b16 %v184
  %v1261 = vunpack.c.l.b16 %v185
  %v1262 = vunpack.c.l.b16 %v186
  %v1263 = vunpack.c.l.b16 %v187
  %v1264 = vunpack.c.l.b16 %v188
  %v1265 = vunpack.c.l.b16 %v189
  %v1266 = vunpack.c.l.b16 %v190
  %v1267 = vunpack.c.l.b16 %v191
  %v1268 = vunpack.c.l.b16 %v192
  %v1269 = vunpack.c.l.b16 %v193
  %v1270 = vunpack.c.l.b16 %v194
  %v1271 = vunpack.c.l.b16 %v195
  %v1272 = vunpack.c.l.b16 %v196
  %v1273 = vunpack.c.l.b16 %v197
  %v1274 = vunpack.c.l.b16 %v198
  %v1275 = vunpack.c.l.b16 %v199
  %v1276 = vunpack.c.l.b16 %v200
  %v1277 = vunpack.c.l.b16 %v201
  %v1278 = vunpack.c.l.b16 %v202
  %v1279 = vunpack.c.l.b16 %v203
  %v1280 = vunpack.c.l.b16 %v204
  %v1281 = vunpack.c.l.b16 %v205
  %v1282 = vunpack.c.l.b16 %v206
  %v1283 = vunpack.c.l.b16 %v207
  %v1284 = vunpack.c.l.b16 %v208
  %v1285 = vunpack.c.l.b16 %v209
  %v1286 = vunpack.c.l.b16 %v210
  %v1287 = vunpack.c.l.b16 %v211
  %v1288 = vunpack.c.l.b16 %v212
  %v1289 = vunpack.c.l.b16 %v213
  %v1290 = vunpack.c.l.b16 %v214
  %v1291 = vunpack.c.l.b16 %v215
  %v1292 = vunpack.c.l.b16 %v216
  %v1293 = vunpack.c.l.b16 %v217
  %v1294 = vunpack.c.l.b16 %v218
  %v1295 = vunpack.c.l.b16 %v219
  %v1296 = vunpack.c.l.b16 %v220
  %v1297 = vunpack.c.l.b16 %v221
  %v1298 = vunpack.c.l.b16 %v222
  %v1299 = vunpack.c.l.b16 %v223
  %v1300 = vunpack.c.l.b16 %v224
  %v1301 = vunpack.c.l.b16 %v225
  %v1302 = vunpack.c.l.b16 %v226
  %v1303 = vunpack.c.l.b16 %v227
  %v1304 = vunpack.c.l.b16 %v228
  %v1305 = vunpack.c.l.b16 %v229
  %v1306 = vunpack.c.l.b16 %v230
  %v1307 = vunpack.c.l.b16 %v231
  %v1308 = vunpack.c.l.b16 %v232
  %v1309 = vunpack.c.l.b16 %v233
  %v1310 = vunpack.c.l.b16 %v234
  %v1311 = vunpack.c.l.b16 %v235
  %v1312 = vunpack.c.l.b16 %v236
  %v1313 = vunpack.c.l.b16 %v237
  %v1314 = vunpack.c.l.b16 %v238
  %v1315 = vunpack.c.l.b16 %v239
  %v1316 = vunpack.c.l.b16 %v240
  %v1317 = vunpack.c.l.b16 %v241
  %v1318 = vunpack.c.l.b16 %v242
  %v1319 = vunpack.c.l.b16 %v243
  %v1320 = vunpack.c.l.b16 %v244
  %v1321 = vunpack.c.l.b16 %v245
  %v1322 = vunpack.c.l.b16 %v246
  %v1323 = vunpack.c.l.b16 %v247
  %v1324 = vunpack.c.l.b16 %v248
  %v1325 = vunpack.c.l.b16 %v249
  %v1326 = vunpack.c.l.b16 %v250
  %v1327 = vunpack.c.l.b16 %v251
  %v1328 = vunpack.c.l.b16 %v252
  %v1329 = vunpack.c.l.b16 %v253
  %v1330 = vunpack.c.l.b16 %v254
  %v1331 = vunpack.c.l.b16 %v255
  %v1332 = vunpack.c.l.b16 %v256
  %v1333 = vunpack.c.l.b16 %v257
  %v1334 = vunpack.c.l.b16 %v258
  %v1335 = vunpack.c.l.b16 %v259
  %v1336 = vunpack.c.l.b16 %v260
  %v1337 = vunpack.c.l.b16 %v261
  %v1338 = vunpack.c.l.b16 %v262
  %v1339 = vunpack.c.l.b16 %v263
  %v1340 = vunpack.c.l.b16 %v264
  %v1341 = vunpack.c.l.b16 %v265
  %v1342 = vunpack.c.l.b16 %v266
  %v1343 = vunpack.c.l.b16 %v267
  %v1344 = vunpack.c.l.b16 %v268
  %v1345 = vunpack.c.l.b16 %v269
  %v1346 = vunpack.c.l.b16 %v270
  %v1347 = vunpack.c.l.b16 %v271
  %v1348 = vunpack.c.l.b16 %v272
  %v1349 = vunpack.c.l.b16 %v273
  %v1350 = vunpack.c.l.b16 %v274
  %v1351 = vunpack.c.l.b16 %v275
  %v1352 = vunpack.c.l.b16 %v276
  %v1353 = vunpack.c.l.b16 %v277
  %v1354 = vunpack.c.l.b16 %v278
  %v1355 = vunpack.c.l.b16 %v279
  %v1356 = vunpack.c.l.b16 %v280
  %v1357 = vunpack.c.l.b16 %v281
  %v1358 = vunpack.c.l.b16 %v282
  %v1359 = vunpack.c.l.b16 %v283
  %v1360 = vunpack.c.l.b16 %v284
  %v1361 = vunpack.c.l.b16 %v285
  %v1362 = vunpack.c.l.b16 %v286
  %v1363 = vunpack.c.l.b16 %v287
  %v1364 = vunpack.c.l.b16 %v288
  %v1365 = vunpack.c.l.b16 %v289
  %v1366 = vunpack.c.l.b16 %v290
  %v1367 = vunpack.c.l.b16 %v291
  %v1368 = vunpack.c.l.b16 %v292
  %v1369 = vunpack.c.l.b16 %v293
  %v1370 = vunpack.c.l.b16 %v294
  %v1371 = vunpack.c.l.b16 %v295
  %v1372 = vunpack.c.l.b16 %v296
  %v1373 = vunpack.c.l.b16 %v297
  %v1374 = vunpack.c.l.b16 %v298
  %v1375 = vunpack.c.l.b16 %v299
  %v1376 = vunpack.c.l.b16 %v300
  %v1377 = vunpack.c.l.b16 %v301
  %v1378 = vunpack.c.l.b16 %v302
  %v1379 = vunpack.c.l.b16 %v303
  %v1380 = vunpack.c.l.b16 %v304
  %v1381 = vunpack.c.l.b16 %v305
  %v1382 = vunpack.c.l.b16 %v306
  %v1383 = vunpack.c.l.b16 %v307
  %v1384 = vunpack.c.l.b16 %v308
  %v1385 = vunpack.c.l.b16 %v309
  %v1386 = vunpack.c.l.b16 %v310
  %v1387 = vunpack.c.l.b16 %v311
  %v1388 = vunpack.c.l.b16 %v312
  %v1389 = vunpack.c.l.b16 %v313
  %v1390 = vunpack.c.l.b16 %v314
  %v1391 = vunpack.c.l.b16 %v315
  %v1392 = vunpack.c.l.b16 %v316
  %v1393 = vunpack.c.l.b16 %v317
  %v1394 = vunpack.c.l.b16 %v318
  %v1395 = vunpack.c.l.b16 %v319
  %v1396 = vunpack.c.l.b16 %v320
  %v1397 = vunpack.c.l.b16 %v321
  %v1398 = vunpack.c.l.b16 %v322
  %v1399 = vunpack.c.l.b16 %v323
  %v1400 = vunpack.c.l.b16 %v324
  %v1401 = vunpack.c.l.b16 %v325
  %v1402 = vunpack.c.l.b16 %v326
  %v1403 = vunpack.c.l.b16 %v327
  %v1404 = vunpack.c.l.b16 %v328
  %v1405 = vunpack.c.l.b16 %v329
  %v1406 = vunpack.c.l.b16 %v330
  %v1407 = vunpack.c.l.b16 %v331
  %v1408 = vunpack.c.l.b16 %v332
  %v1409 = vunpack.c.l.b16 %v333
  %v1410 = vunpack.c.l.b16 %v334
  %v1411 = vunpack.c.l.b16 %v335
  %v1412 = vunpack.c.l.b16 %v336
  %v1413 = vunpack.c.l.b16 %v337
  %v1414 = vunpack.c.l.b16 %v338
  %v1415 = vunpack.c.l.b16 %v339
  %v1416 = vunpack.c.l.b16 %v340
  %v1417 = vunpack.c.l.b16 %v341
  %v1418 = vunpack.c.l.b16 %v342
  %v1419 = vunpack.c.l.b16 %v343
  %v1420 = vunpack.c.l.b16 %v344
  %v1421 = vunpack.c.l.b16 %v345
  %v1422 = vunpack.c.l.b16 %v346
  %v1423 = vunpack.c.l.b16 %v347
  %v1424 = vunpack.c.l.b16 %v348
  %v1425 = vunpack.c.l.b16 %v349
  %v1426 = vunpack.c.l.b16 %v350
  %v1427 = vunpack.c.l.b16 %v351
  %v1428 = vunpack.c.l.b16 %v352
  %v1429 = vunpack.c.l.b16 %v353
  %v1430 = vunpack.c.l.b16 %v354
  %v1431 = vunpack.c.l.b16 %v355
  %v1432 = vunpack.c.l.b16 %v356
  %v1433 = vunpack.c.l.b16 %v357
  %v1434 = vunpack.c.l.b16 %v358
  %v1435 = vunpack.c.l.b16 %v359
  %v1436 = vunpack.c.l.b16 %v360
  %v1437 = vunpack.c.l.b16 %v361
  %v1438 = vunpack.c.l.b16 %v362
  %v1439 = vunpack.c.l.b16 %v363
  %v1440 = vunpack.c.l.b16 %v364
  %v1441 = vunpack.c.l.b16 %v365
  %v1442 = vunpack.c.l.b16 %v366
  %v1443 = vunpack.c.l.b16 %v367
  %v1444 = vunpack.c.l.b16 %v368
  %v1445 = vunpack.c.l.b16 %v369
  %v1446 = vunpack.c.l.b16 %v370
  %v1447 = vunpack.c.l.b16 %v371
  %v1448 = vunpack.c.l.b16 %v372
  %v1449 = vunpack.c.l.b16 %v373
  %v1450 = vunpack.c.l.b16 %v374
  %v1451 = vunpack.c.l.b16 %v375
  %v1452 = vunpack.c.l.b16 %v376
  %v1453 = vunpack.c.l.b16 %v377
  %v1454 = vunpack.c.l.b16 %v378
  %v1455 = vunpack.c.l.b16 %v379
  %v1456 = vunpack.c.l.b16 %v380
  %v1457 = vunpack.c.l.b16 %v381
  %v1458 = vunpack.c.l.b16 %v382
  %v1459 = vunpack.c.l.b16 %v383
  %v1460 = vunpack.c.l.b16 %v384
  %v1461 = vunpack.c.l.b16 %v385
  %v1462 = vunpack.c.l.b16 %v386
  %v1463 = vunpack.c.l.b16 %v387
  %v1464 = vunpack.c.l.b16 %v388
  %v1465 = vunpack.c.l.b16 %v389
  %v1466 = vunpack.c.l.b16 %v390
  %v1467 = vunpack.c.l.b16 %v391
  %v1468 = vunpack.c.l.b16 %v392
  %v1469 = vunpack.c.l.b16 %v393
  %v1470 = vunpack.c.l.b16 %v394
  %v1471 = vunpack.c.l.b16 %v395
  %v1472 = vunpack.c.l.b16 %v396
  %v1473 = vunpack.c.l.b16 %v397
  %v1474 = vunpack.c.l.b16 %v398
  %v1475 = vunpack.c.l.b16 %v399
  %v1476 = vunpack.c.l.b16 %v400
  %v1477 = vunpack.c.l.b16 %v401
  %v1478 = vunpack.c.l.b16 %v402
  %v1479 = vunpack.c.l.b16 %v403
  %v1480 = vunpack.c.l.b16 %v404
  %v1481 = vunpack.c.l.b16 %v405
  %v1482 = vunpack.c.l.b16 %v406
  %v1483 = vunpack.c.l.b16 %v407
  %v1484 = vunpack.c.l.b16 %v408
  %v1485 = vunpack.c.l.b16 %v409
  %v1486 = vunpack.c.l.b16 %v410
  %v1487 = vunpack.c.l.b16 %v411
  %v1488 = vunpack.c.l.b16 %v412
  %v1489 = vunpack.c.l.b16 %v413
  %v1490 = vunpack.c.l.b16 %v414
  %v1491 = vunpack.c.l.b16 %v415
  %v1492 = vunpack.c.l.b16 %v416
  %v1493 = vunpack.c.l.b16 %v417
  %v1494 = vunpack.c.l.b16 %v418
  %v1495 = vunpack.c.l.b16 %v419
  %v1496 = vunpack.c.l.b16 %v420
  %v1497 = vunpack.c.l.b16 %v421
  %v1498 = vunpack.c.l.b16 %v422
  %v1499 = vunpack.c.l.b16 %v423
  %v1500 = vunpack.c.l.b16 %v424
  %v1501 = vunpack.c.l.b16 %v425
  %v1502 = vunpack.c.l.b16 %v426
  %v1503 = vunpack.c.l.b16 %v427
  %v1504 = vunpack.c.l.b16 %v428
  %v1505 = vunpack.c.l.b16 %v429
  %v1506 = vunpack.c.l.b16 %v430
  %v1507 = vunpack.c.l.b16 %v431
  %v1508 = vunpack.c.l.b16 %v432
  %v1509 = vunpack.c.l.b16 %v433
  %v1510 = vunpack.c.l.b16 %v434
  %v1511 = vunpack.c.l.b16 %v435
  %v1512 = vunpack.c.l.b16 %v436
  %v1513 = vunpack.c.l.b16 %v437
  %v1514 = vunpack.c.l.b16 %v438
  %v1515 = vunpack.c.l.b16 %v439
  %v1516 = vunpack.c.l.b16 %v440
  %v1517 = vunpack.c.l.b16 %v441
  %v1518 = vunpack.c.l.b16 %v442
  %v1519 = vunpack.c.l.b16 %v443
  %v1520 = vunpack.c.l.b16 %v444
  %v1521 = vunpack.c.l.b16 %v445
  %v1522 = vunpack.c.l.b16 %v446
  %v1523 = vunpack.c.l.b16 %v447
  %v1524 = vunpack.c.l.b16 %v448
  %v1525 = vunpack.c.l.b16 %v449
  %v1526 = vunpack.c.l.b16 %v450
  %v1527 = vunpack.c.l.b16 %v451
  %v1528 = vunpack.c.l.b16 %v452
  %v1529 = vunpack.c.l.b16 %v453
  %v1530 = vunpack.c.l.b16 %v454
  %v1531 = vunpack.c.l.b16 %v455
  %v1532 = vunpack.c.l.b16 %v456
  %v1533 = vunpack.c.l.b16 %v457
  %v1534 = vunpack.c.l.b16 %v458
  %v1535 = vunpack.c.l.b16 %v459
  %v1536 = vunpack.c.l.b16 %v460
  %v1537 = vunpack.c.l.b16 %v461
  %v1538 = vunpack.c.l.b16 %v462
  %v1539 = vunpack.c.l.b16 %v463
  %v1540 = vunpack.c.l.b16 %v464
  %v1541 = vunpack.c.l.b16 %v465
  %v1542 = vunpack.c.l.b16 %v466
  %v1543 = vunpack.c.l.b16 %v467
  %v1544 = vunpack.c.l.b16 %v468
  %v1545 = vunpack.c.l.b16 %v469
  %v1546 = vunpack.c.l.b16 %v470
  %v1547 = vunpack.c.l.b16 %v471
  %v1548 = vunpack.c.l.b16 %v472
  %v1549 = vunpack.c.l.b16 %v473
  %v1550 = vunpack.c.l.b16 %v474
  %v1551 = vunpack.c.l.b16 %v475
  %v1552 = vpack.c.b16 %v1144, %v1143
  %v1553 = vpack.c.b16 %v1146, %v1145
  %v1554 = vpack.c.b16 %v1148, %v1147
  %v1555 = vpack.c.b16 %v1150, %v1149
  %v1556 = vpack.c.b16 %v1152, %v1151
  %v1557 = vpack.c.b16 %v1154, %v1153
  %v1558 = vpack.c.b16 %v1156, %v1155
  %v1559 = vpack.c.b16 %v1158, %v1157
  %v1560 = vpack.c.b16 %v1160, %v1159
  %v1561 = vpack.c.b16 %v1162, %v1161
  %v1562 = vpack.c.b16 %v1164, %v1163
  %v1563 = vpack.c.b16 %v1166, %v1165
  %v1564 = vpack.c.b16 %v1168, %v1167
  %v1565 = vpack.c.b16 %v1170, %v1169
  %v1566 = vpack.c.b16 %v1172, %v1171
  %v1567 = vpack.c.b16 %v1174, %v1173
  %v1568 = vpack.c.b16 %v1176, %v1175
  %v1569 = vpack.c.b16 %v1178, %v1177
  %v1570 = vpack.c.b16 %v1180, %v1179
  %v1571 = vpack.c.b16 %v1182, %v1181
  %v1572 = vpack.c.b16 %v1184, %v1183
  %v1573 = vpack.c.b16 %v1186, %v1185
  %v1574 = vpack.c.b16 %v1188, %v1187
  %v1575 = vpack.c.b16 %v1190, %v1189
  %v1576 = vpack.c.b16 %v1192, %v1191
  %v1577 = vpack.c.b16 %v1194, %v1193
  %v1578 = vpack.c.b16 %v1196, %v1195
  %v1579 = vpack.c.b16 %v1198, %v1197
  %v1580 = vpack.c.b16 %v1200, %v1199
  %v1581 = vpack.c.b16 %v1202, %v1201
  %v1582 = vpack.c.b16 %v1204, %v1203
  %v1583 = vpack.c.b16 %v1206, %v1205
  %v1584 = vpack.c.b16 %v1208, %v1207
  %v1585 = vpack.c.b16 %v1210, %v1209
  %v1586 = vpack.c.b16 %v1212, %v1211
  %v1587 = vpack.c.b16 %v1214, %v1213
  %v1588 = vpack.c.b16 %v1216, %v1215
  %v1589 = vpack.c.b16 %v1218, %v1217
  %v1590 = vpack.c.b16 %v1220, %v1219
  %v1591 = vpack.c.b16 %v1222, %v1221
  %v1592 = vpack.c.b16 %v1224, %v1223
  %v1593 = vpack.c.b16 %v1226, %v1225
  %v1594 = vpack.c.b16 %v1228, %v1227
  %v1595 = vpack.c.b16 %v1230, %v1229
  %v1596 = vpack.c.b16 %v1232, %v1231
  %v1597 = vpack.c.b16 %v1234, %v1233
  %v1598 = vpack.c.b16 %v1236, %v1235
  %v1599 = vpack.c.b16 %v1238, %v1237
  %v1600 = vpack.c.b16 %v1240, %v1239
  %v1601 = vpack.c.b16 %v1242, %v1241
  %v1602 = vpack.c.b16 %v1244, %v1243
  %v1603 = vpack.c.b16 %v1246, %v1245
  %v1604 = vpack.c.b16 %v1248, %v1247
  %v1605 = vpack.c.b16 %v1250, %v1249
  %v1606 = vpack.c.b16 %v1252, %v1251
  %v1607 = vpack.c.b16 %v1254, %v1253
  %v1608 = vpack.c.b16 %v1256, %v1255
  %v1609 = vpack.c.b16 %v1258, %v1257
  %v1610 = vpack.c.b16 %v1260, %v1259
  %v1611 = vpack.c.b16 %v1262, %v1261
  %v1612 = vpack.c.b16 %v1264, %v1263
  %v1613 = vpack.c.b16 %v1266, %v1265
  %v1614 = vpack.c.b16 %v1268, %v1267
  %v1615 = vpack.c.b16 %v1270, %v1269
  %v1616 = vpack.c.b16 %v1272, %v1271
  %v1617 = vpack.c.b16 %v1274, %v1273
  %v1618 = vpack.c.b16 %v1276, %v1275
  %v1619 = vpack.c.b16 %v1278, %v1277
  %v1620 = vpack.c.b16 %v1280, %v1279
  %v1621 = vpack.c.b16 %v1282, %v1281
  %v1622 = vpack.c.b16 %v1284, %v1283
  %v1623 = vpack.c.b16 %v1286, %v1285
  %v1624 = vpack.c.b16 %v1288, %v1287
  %v1625 = vpack.c.b16 %v1290, %v1289
  %v1626 = vpack.c.b16 %v1292, %v1291
  %v1627 = vpack.c.b16 %v1294, %v1293
  %v1628 = vpack.c.b16 %v1296, %v1295
  %v1629 = vpack.c.b16 %v1298, %v1297
  %v1630 = vpack.c.b16 %v1300, %v1299
  %v1631 = vpack.c.b16 %v1302, %v1301
  %v1632 = vpack.c.b16 %v1304, %v1303
  %v1633 = vpack.c.b16 %v1306, %v1305
  %v1634 = vpack.c.b16 %v1308, %v1307
  %v1635 = vpack.c.b16 %v1310, %v1309
  %v1636 = vpack.c.b16 %v1312, %v1311
  %v1637 = vpack.c.b16 %v1314, %v1313
  %v1638 = vpack.c.b16 %v1316, %v1315
  %v1639 = vpack.c.b16 %v1318, %v1317
  %v1640 = vpack.c.b16 %v1320, %v1319
  %v1641 = vpack.c.b16 %v1322, %v1321
  %v1642 = vpack.c.b16 %v1324, %v1323
  %v1643 = vpack.c.b16 %v1326, %v1325
  %v1644 = vpack.c.b16 %v1328, %v1327
  %v1645 = vpack.c.b16 %v1330, %v1329
  %v1646 = vpack.c.b16 %v1332, %v1331
  %v1647 = vpack.c.b16 %v1334, %v1333
  %v1648 = vpack.c.b16 %v1336, %v1335
  %v1649 = vpack.c.b16 %v1338, %v1337
  %v1650 = vpack.c.b16 %v1340, %v1339
  %v1651 = vpack.c.b16 %v1342, %v1341
  %v1652 = vpack.c.b16 %v1344, %v1343
  %v1653 = vpack.c.b16 %v1346, %v1345
  %v1654 = vpack.c.b16 %v1348, %v1347
  %v1655 = vpack.c.b16 %v1350, %v1349
  %v1656 = vpack.c.b16 %v1352, %v1351
  %v1657 = vpack.c.b16 %v1354, %v1353
  %v1658 = vpack.c.b16 %v1356, %v1355
  %v1659 = vpack.c.b16 %v1358, %v1357
  %v1660 = vpack.c.b16 %v1360, %v1359
  %v1661 = vpack.c.b16 %v1362, %v1361
  %v1662 = vpack.c.b16 %v1364, %v1363
  %v1663 = vpack.c.b16 %v1366, %v1365
  %v1664 = vpack.c.b16 %v1368, %v1367
  %v1665 = vpack.c.b16 %v1370, %v1369
  %v1666 = vpack.c.b16 %v1372, %v1371
  %v1667 = vpack.c.b16 %v1374, %v1373
  %v1668 = vpack.c.b16 %v1376, %v1375
  %v1669 = vpack.c.b16 %v1378, %v1377
  %v1670 = vpack.c.b16 %v1380, %v1379
  %v1671 = vpack.c.b16 %v1382, %v1381
  %v1672 = vpack.c.b16 %v1384, %v1383
  %v1673 = vpack.c.b16 %v1386, %v1385
  %v1674 = vpack.c.b16 %v1388, %v1387
  %v1675 = vpack.c.b16 %v1390, %v1389
  %v1676 = vpack.c.b16 %v1392, %v1391
  %v1677 = vpack.c.b16 %v1394, %v1393
  %v1678 = vpack.c.b16 %v1396, %v1395
  %v1679 = vpack.c.b16 %v1398, %v1397
  %v1680 = vpack.c.b16 %v1400, %v1399
  %v1681 = vpack.c.b16 %v1402, %v1401
  %v1682 = vpack.c.b16 %v1404, %v1403
  %v1683 = vpack.c.b16 %v1406, %v1405
  %v1684 = vpack.c.b16 %v1408, %v1407
  %v1685 = vpack.c.b16 %v1410, %v1409
  %v1686 = vpack.c.b16 %v1412, %v1411
  %v1687 = vpack.c.b16 %v1414, %v1413
  %v1688 = vpack.c.b16 %v1416, %v1415
  %v1689 = vpack.c.b16 %v1418, %v1417
  %v1690 = vpack.c.b16 %v1420, %v1419
  %v1691 = vpack.c.b16 %v1422, %v1421
  %v1692 = vpack.c.b16 %v1424, %v1423
  %v1693 = vpack.c.b16 %v1426, %v1425
  %v1694 = vpack.c.b16 %v1428, %v1427
  %v1695 = vpack.c.b16 %v1430, %v1429
  %v1696 = vpack.c.b16 %v1432, %v1431
  %v1697 = vpack.c.b16 %v1434, %v1433
  %v1698 = vpack.c.b16 %v1436, %v1435
  %v1699 = vpack.c.b16 %v1438, %v1437
  %v1700 = vpack.c.b16 %v1440, %v1439
  %v1701 = vpack.c.b16 %v1442, %v1441
  %v1702 = vpack.c.b16 %v1444, %v1443
  %v1703 = vpack.c.b16 %v1446, %v1445
  %v1704 = vpack.c.b16 %v1448, %v1447
  %v1705 = vpack.c.b16 %v1450, %v1449
  %v1706 = vpack.c.b16 %v1452, %v1451
  %v1707 = vpack.c.b16 %v1454, %v1453
  %v1708 = vpack.c.b16 %v1456, %v1455
  %v1709 = vpack.c.b16 %v1458, %v1457
  %v1710 = vpack.c.b16 %v1460, %v1459
  %v1711 = vpack.c.b16 %v1462, %v1461
  %v1712 = vpack.c.b16 %v1464, %v1463
  %v1713 = vpack.c.b16 %v1466, %v1465
  %v1714 = vpack.c.b16 %v1468, %v1467
  %v1715 = vpack.c.b16 %v1470, %v1469
  %v1716 = vpack.c.b16 %v1472, %v1471
  %v1717 = vpack.c.b16 %v1474, %v1473
  %v1718 = vpack.c.b16 %v1476, %v1475
  %v1719 = vpack.c.b16 %v1478, %v1477
  %v1720 = vpack.c.b16 %v1480, %v1479
  %v1721 = vpack.c.b16 %v1482, %v1481
  %v1722 = vpack.c.b16 %v1484, %v1483
  %v1723 = vpack.c.b16 %v1486, %v1485
  %v1724 = vpack.c.b16 %v1488, %v1487
  %v1725 = vpack.c.b16 %v1490, %v1489
  %v1726 = vpack.c.b16 %v1492, %v1491
  %v1727 = vpack.c.b16 %v1494, %v1493
  %v1728 = vpack.c.b16 %v1496, %v1495
  %v1729 = vpack.c.b16 %v1498, %v1497
  %v1730 = vpack.c.b16 %v1500, %v1499
  %v1731 = vpack.c.b16 %v1502, %v1501
  %v1732 = vpack.c.b16 %v1504, %v1503
  %v1733 = vpack.c.b16 %v1506, %v1505
  %v1734 = vpack.c.b16 %v1508, %v1507
  %v1735 = vpack.c.b16 %v1510, %v1509
  %v1736 = vpack.c.b16 %v1512, %v1511
  %v1737 = vpack.c.b16 %v1514, %v1513
  %v1738 = vpack.c.b16 %v1516, %v1515
  %v1739 = vpack.c.b16 %v1518, %v1517
  %v1740 = vpack.c.b16 %v1520, %v1519
  %v1741 = vpack.c.b16 %v1522, %v1521
  %v1742 = vpack.c.b16 %v1524, %v1523
  %v1743 = vpack.c.b16 %v1526, %v1525
  %v1744 = vpack.c.b16 %v1528, %v1527
  %v1745 = vpack.c.b16 %v1530, %v1529
  %v1746 = vpack.c.b16 %v1532, %v1531
  %v1747 = vpack.c.b16 %v1534, %v1533
  %v1748 = vpack.c.b16 %v1536, %v1535
  %v1749 = vpack.c.b16 %v1538, %v1537
  %v1750 = vpack.c.b16 %v1540, %v1539
  %v1751 = vpack.c.b16 %v1542, %v1541
  %v1752 = vpack.c.b16 %v1544, %v1543
  %v1753 = vpack.c.b16 %v1546, %v1545
  %v1754 = vpack.c.b16 %v1548, %v1547
  %v1755 = vpack.c.b16 %v1550, %v1549
  %v1756 = vpack.c.b16 %v1551, %v1551
  %vm1961 = vcmask 547840
  %v1963 = vsel %vm1961, %v657, 0
  %v1966 = vsel %vm1961, %v683, 0
  %vm1968 = vcmask 1040384
  %vm1969 = vcmask 1041408
  %v1970 = vsel %vm1968, 4294967295, 65535
  %v1971 = vsel %vm1969, %v1970, 0
  %v1973 = vand.u32 %v1756, %v1971
  %1975 = vmatprep.subr.bf16.mxu0 0
  %1976 = vmatpush1.bf16.msra.mxu0 %v1552
  %1977 = vmatprep.subr.bf16.mxu0 0
  %1978 = vmatpush1.bf16.msra.mxu0 %v1553
  %1979 = vmatprep.subr.bf16.mxu0 0
  %1980 = vmatpush1.bf16.msra.mxu0 %v1554
  %1981 = vmatprep.subr.bf16.mxu0 0
  %1982 = vmatpush1.bf16.msra.mxu0 %v1555
  %1983 = vmatprep.subr.bf16.mxu0 0
  %1984 = vmatpush1.bf16.msra.mxu0 %v1556
  %1985 = vmatprep.subr.bf16.mxu0 0
  %1986 = vmatpush1.bf16.msra.mxu0 %v1557
  %1987 = vmatprep.subr.bf16.mxu0 0
  %1988 = vmatpush1.bf16.msra.mxu0 %v1558
  %1989 = vmatprep.subr.bf16.mxu0 0
  %1990 = vmatpush1.bf16.msra.mxu0 %v1559
  %1991 = vmatprep.subr.bf16.mxu0 0
  %1992 = vmatpush1.bf16.msra.mxu0 %v1560
  %1993 = vmatprep.subr.bf16.mxu0 0
  %1994 = vmatpush1.bf16.msra.mxu0 %v1561
  %1995 = vmatprep.subr.bf16.mxu0 0
  %1996 = vmatpush1.bf16.msra.mxu0 %v1562
  %1997 = vmatprep.subr.bf16.mxu0 0
  %1998 = vmatpush1.bf16.msra.mxu0 %v1563
  %1999 = vmatprep.subr.bf16.mxu0 0
  %2000 = vmatpush1.bf16.msra.mxu0 %v1564
  %2001 = vmatprep.subr.bf16.mxu0 0
  %2002 = vmatpush1.bf16.msra.mxu0 %v1565
  %2003 = vmatprep.subr.bf16.mxu0 0
  %2004 = vmatpush1.bf16.msra.mxu0 %v1566
  %2005 = vmatprep.subr.bf16.mxu0 0
  %2006 = vmatpush1.bf16.msra.mxu0 %v1567
  %2007 = vmatprep.mubr.bf16.mxu0 %v633
  %2008 = vmatmul.mubr.bf16.gmra.mrb[0].mxu0 %v632
  %v2009 = vpop.f32.mrb[0].mxu0
  %v2010 = vadd.f32 0.0, %v2009
  %v2011 = vpop.f32.mrb[0].mxu0
  %v2012 = vpop.f32.mrb[0].mxu0
  %v2013 = vadd.f32 0.0, %v2012
  %v2014 = vpop.f32.mrb[0].mxu0
  %2015 = vmatprep.mubr.bf16.mxu0 %v659
  %2016 = vmatmul.mubr.bf16.gmra.mrb[0].mxu0 %v658
  %v2017 = vpop.f32.mrb[0].mxu0
  %v2018 = vadd.f32 0.0, %v2017
  %v2019 = vpop.f32.mrb[0].mxu0
  %v2020 = vpop.f32.mrb[0].mxu0
  %v2021 = vadd.f32 0.0, %v2020
  %v2022 = vpop.f32.mrb[0].mxu0
  %2023 = vdwg.mxu0
  %2024 = vmatprep.subr.bf16.mxu0 0
  %2025 = vmatpush1.bf16.msra.mxu0 %v1568
  %2026 = vmatprep.subr.bf16.mxu0 0
  %2027 = vmatpush1.bf16.msra.mxu0 %v1569
  %2028 = vmatprep.subr.bf16.mxu0 0
  %2029 = vmatpush1.bf16.msra.mxu0 %v1570
  %2030 = vmatprep.subr.bf16.mxu0 0
  %2031 = vmatpush1.bf16.msra.mxu0 %v1571
  %2032 = vmatprep.subr.bf16.mxu0 0
  %2033 = vmatpush1.bf16.msra.mxu0 %v1572
  %2034 = vmatprep.subr.bf16.mxu0 0
  %2035 = vmatpush1.bf16.msra.mxu0 %v1573
  %2036 = vmatprep.subr.bf16.mxu0 0
  %2037 = vmatpush1.bf16.msra.mxu0 %v1574
  %2038 = vmatprep.subr.bf16.mxu0 0
  %2039 = vmatpush1.bf16.msra.mxu0 %v1575
  %2040 = vmatprep.subr.bf16.mxu0 0
  %2041 = vmatpush1.bf16.msra.mxu0 %v1576
  %2042 = vmatprep.subr.bf16.mxu0 0
  %2043 = vmatpush1.bf16.msra.mxu0 %v1577
  %2044 = vmatprep.subr.bf16.mxu0 0
  %2045 = vmatpush1.bf16.msra.mxu0 %v1578
  %2046 = vmatprep.subr.bf16.mxu0 0
  %2047 = vmatpush1.bf16.msra.mxu0 %v1579
  %2048 = vmatprep.subr.bf16.mxu0 0
  %2049 = vmatpush1.bf16.msra.mxu0 %v1580
  %2050 = vmatprep.subr.bf16.mxu0 0
  %2051 = vmatpush1.bf16.msra.mxu0 %v1581
  %2052 = vmatprep.subr.bf16.mxu0 0
  %2053 = vmatpush1.bf16.msra.mxu0 %v1582
  %2054 = vmatprep.subr.bf16.mxu0 0
  %2055 = vmatpush1.bf16.msra.mxu0 %v1583
  %2056 = vmatprep.mubr.bf16.mxu0 %v635
  %2057 = vmatmul.mubr.bf16.gmra.mrb[0].mxu0 %v634
  %v2058 = vpop.f32.mrb[0].mxu0
  %v2059 = vadd.f32 %v2010, %v2058
  %v2060 = vpop.f32.mrb[0].mxu0
  %v2061 = vpop.f32.mrb[0].mxu0
  %v2062 = vadd.f32 %v2013, %v2061
  %v2063 = vpop.f32.mrb[0].mxu0
  %2064 = vmatprep.mubr.bf16.mxu0 %v661
  %2065 = vmatmul.mubr.bf16.gmra.mrb[0].mxu0 %v660
  %v2066 = vpop.f32.mrb[0].mxu0
  %v2067 = vadd.f32 %v2018, %v2066
  %v2068 = vpop.f32.mrb[0].mxu0
  %v2069 = vpop.f32.mrb[0].mxu0
  %v2070 = vadd.f32 %v2021, %v2069
  %v2071 = vpop.f32.mrb[0].mxu0
  %2072 = vdwg.mxu0
  %2073 = vmatprep.subr.bf16.mxu0 0
  %2074 = vmatpush1.bf16.msra.mxu0 %v1584
  %2075 = vmatprep.subr.bf16.mxu0 0
  %2076 = vmatpush1.bf16.msra.mxu0 %v1585
  %2077 = vmatprep.subr.bf16.mxu0 0
  %2078 = vmatpush1.bf16.msra.mxu0 %v1586
  %2079 = vmatprep.subr.bf16.mxu0 0
  %2080 = vmatpush1.bf16.msra.mxu0 %v1587
  %2081 = vmatprep.subr.bf16.mxu0 0
  %2082 = vmatpush1.bf16.msra.mxu0 %v1588
  %2083 = vmatprep.subr.bf16.mxu0 0
  %2084 = vmatpush1.bf16.msra.mxu0 %v1589
  %2085 = vmatprep.subr.bf16.mxu0 0
  %2086 = vmatpush1.bf16.msra.mxu0 %v1590
  %2087 = vmatprep.subr.bf16.mxu0 0
  %2088 = vmatpush1.bf16.msra.mxu0 %v1591
  %2089 = vmatprep.subr.bf16.mxu0 0
  %2090 = vmatpush1.bf16.msra.mxu0 %v1592
  %2091 = vmatprep.subr.bf16.mxu0 0
  %2092 = vmatpush1.bf16.msra.mxu0 %v1593
  %2093 = vmatprep.subr.bf16.mxu0 0
  %2094 = vmatpush1.bf16.msra.mxu0 %v1594
  %2095 = vmatprep.subr.bf16.mxu0 0
  %2096 = vmatpush1.bf16.msra.mxu0 %v1595
  %2097 = vmatprep.subr.bf16.mxu0 0
  %2098 = vmatpush1.bf16.msra.mxu0 %v1596
  %2099 = vmatprep.subr.bf16.mxu0 0
  %2100 = vmatpush1.bf16.msra.mxu0 %v1597
  %2101 = vmatprep.subr.bf16.mxu0 0
  %2102 = vmatpush1.bf16.msra.mxu0 %v1598
  %2103 = vmatprep.subr.bf16.mxu0 0
  %2104 = vmatpush1.bf16.msra.mxu0 %v1599
  %2105 = vmatprep.mubr.bf16.mxu0 %v637
  %2106 = vmatmul.mubr.bf16.gmra.mrb[0].mxu0 %v636
  %v2107 = vpop.f32.mrb[0].mxu0
  %v2108 = vadd.f32 %v2059, %v2107
  %v2109 = vpop.f32.mrb[0].mxu0
  %v2110 = vpop.f32.mrb[0].mxu0
  %v2111 = vadd.f32 %v2062, %v2110
  %v2112 = vpop.f32.mrb[0].mxu0
  %2113 = vmatprep.mubr.bf16.mxu0 %v663
  %2114 = vmatmul.mubr.bf16.gmra.mrb[0].mxu0 %v662
  %v2115 = vpop.f32.mrb[0].mxu0
  %v2116 = vadd.f32 %v2067, %v2115
  %v2117 = vpop.f32.mrb[0].mxu0
  %v2118 = vpop.f32.mrb[0].mxu0
  %v2119 = vadd.f32 %v2070, %v2118
  %v2120 = vpop.f32.mrb[0].mxu0
  %2121 = vdwg.mxu0
  %2122 = vmatprep.subr.bf16.mxu0 0
  %2123 = vmatpush1.bf16.msra.mxu0 %v1600
  %2124 = vmatprep.subr.bf16.mxu0 0
  %2125 = vmatpush1.bf16.msra.mxu0 %v1601
  %2126 = vmatprep.subr.bf16.mxu0 0
  %2127 = vmatpush1.bf16.msra.mxu0 %v1602
  %2128 = vmatprep.subr.bf16.mxu0 0
  %2129 = vmatpush1.bf16.msra.mxu0 %v1603
  %2130 = vmatprep.subr.bf16.mxu0 0
  %2131 = vmatpush1.bf16.msra.mxu0 %v1604
  %2132 = vmatprep.subr.bf16.mxu0 0
  %2133 = vmatpush1.bf16.msra.mxu0 %v1605
  %2134 = vmatprep.subr.bf16.mxu0 0
  %2135 = vmatpush1.bf16.msra.mxu0 %v1606
  %2136 = vmatprep.subr.bf16.mxu0 0
  %2137 = vmatpush1.bf16.msra.mxu0 %v1607
  %2138 = vmatprep.subr.bf16.mxu0 0
  %2139 = vmatpush1.bf16.msra.mxu0 %v1608
  %2140 = vmatprep.subr.bf16.mxu0 0
  %2141 = vmatpush1.bf16.msra.mxu0 %v1609
  %2142 = vmatprep.subr.bf16.mxu0 0
  %2143 = vmatpush1.bf16.msra.mxu0 %v1610
  %2144 = vmatprep.subr.bf16.mxu0 0
  %2145 = vmatpush1.bf16.msra.mxu0 %v1611
  %2146 = vmatprep.subr.bf16.mxu0 0
  %2147 = vmatpush1.bf16.msra.mxu0 %v1612
  %2148 = vmatprep.subr.bf16.mxu0 0
  %2149 = vmatpush1.bf16.msra.mxu0 %v1613
  %2150 = vmatprep.subr.bf16.mxu0 0
  %2151 = vmatpush1.bf16.msra.mxu0 %v1614
  %2152 = vmatprep.subr.bf16.mxu0 0
  %2153 = vmatpush1.bf16.msra.mxu0 %v1615
  %2154 = vmatprep.mubr.bf16.mxu0 %v639
  %2155 = vmatmul.mubr.bf16.gmra.mrb[0].mxu0 %v638
  %v2156 = vpop.f32.mrb[0].mxu0
  %v2157 = vadd.f32 %v2108, %v2156
  %v2158 = vpop.f32.mrb[0].mxu0
  %v2159 = vpop.f32.mrb[0].mxu0
  %v2160 = vadd.f32 %v2111, %v2159
  %v2161 = vpop.f32.mrb[0].mxu0
  %2162 = vmatprep.mubr.bf16.mxu0 %v665
  %2163 = vmatmul.mubr.bf16.gmra.mrb[0].mxu0 %v664
  %v2164 = vpop.f32.mrb[0].mxu0
  %v2165 = vadd.f32 %v2116, %v2164
  %v2166 = vpop.f32.mrb[0].mxu0
  %v2167 = vpop.f32.mrb[0].mxu0
  %v2168 = vadd.f32 %v2119, %v2167
  %v2169 = vpop.f32.mrb[0].mxu0
  %2170 = vdwg.mxu0
  %2171 = vmatprep.subr.bf16.mxu0 0
  %2172 = vmatpush1.bf16.msra.mxu0 %v1616
  %2173 = vmatprep.subr.bf16.mxu0 0
  %2174 = vmatpush1.bf16.msra.mxu0 %v1617
  %2175 = vmatprep.subr.bf16.mxu0 0
  %2176 = vmatpush1.bf16.msra.mxu0 %v1618
  %2177 = vmatprep.subr.bf16.mxu0 0
  %2178 = vmatpush1.bf16.msra.mxu0 %v1619
  %2179 = vmatprep.subr.bf16.mxu0 0
  %2180 = vmatpush1.bf16.msra.mxu0 %v1620
  %2181 = vmatprep.subr.bf16.mxu0 0
  %2182 = vmatpush1.bf16.msra.mxu0 %v1621
  %2183 = vmatprep.subr.bf16.mxu0 0
  %2184 = vmatpush1.bf16.msra.mxu0 %v1622
  %2185 = vmatprep.subr.bf16.mxu0 0
  %2186 = vmatpush1.bf16.msra.mxu0 %v1623
  %2187 = vmatprep.subr.bf16.mxu0 0
  %2188 = vmatpush1.bf16.msra.mxu0 %v1624
  %2189 = vmatprep.subr.bf16.mxu0 0
  %2190 = vmatpush1.bf16.msra.mxu0 %v1625
  %2191 = vmatprep.subr.bf16.mxu0 0
  %2192 = vmatpush1.bf16.msra.mxu0 %v1626
  %2193 = vmatprep.subr.bf16.mxu0 0
  %2194 = vmatpush1.bf16.msra.mxu0 %v1627
  %2195 = vmatprep.subr.bf16.mxu0 0
  %2196 = vmatpush1.bf16.msra.mxu0 %v1628
  %2197 = vmatprep.subr.bf16.mxu0 0
  %2198 = vmatpush1.bf16.msra.mxu0 %v1629
  %2199 = vmatprep.subr.bf16.mxu0 0
  %2200 = vmatpush1.bf16.msra.mxu0 %v1630
  %2201 = vmatprep.subr.bf16.mxu0 0
  %2202 = vmatpush1.bf16.msra.mxu0 %v1631
  %2203 = vmatprep.mubr.bf16.mxu0 %v641
  %2204 = vmatmul.mubr.bf16.gmra.mrb[0].mxu0 %v640
  %v2205 = vpop.f32.mrb[0].mxu0
  %v2206 = vadd.f32 %v2157, %v2205
  %v2207 = vpop.f32.mrb[0].mxu0
  %v2208 = vpop.f32.mrb[0].mxu0
  %v2209 = vadd.f32 %v2160, %v2208
  %v2210 = vpop.f32.mrb[0].mxu0
  %2211 = vmatprep.mubr.bf16.mxu0 %v667
  %2212 = vmatmul.mubr.bf16.gmra.mrb[0].mxu0 %v666
  %v2213 = vpop.f32.mrb[0].mxu0
  %v2214 = vadd.f32 %v2165, %v2213
  %v2215 = vpop.f32.mrb[0].mxu0
  %v2216 = vpop.f32.mrb[0].mxu0
  %v2217 = vadd.f32 %v2168, %v2216
  %v2218 = vpop.f32.mrb[0].mxu0
  %2219 = vdwg.mxu0
  %2220 = vmatprep.subr.bf16.mxu0 0
  %2221 = vmatpush1.bf16.msra.mxu0 %v1632
  %2222 = vmatprep.subr.bf16.mxu0 0
  %2223 = vmatpush1.bf16.msra.mxu0 %v1633
  %2224 = vmatprep.subr.bf16.mxu0 0
  %2225 = vmatpush1.bf16.msra.mxu0 %v1634
  %2226 = vmatprep.subr.bf16.mxu0 0
  %2227 = vmatpush1.bf16.msra.mxu0 %v1635
  %2228 = vmatprep.subr.bf16.mxu0 0
  %2229 = vmatpush1.bf16.msra.mxu0 %v1636
  %2230 = vmatprep.subr.bf16.mxu0 0
  %2231 = vmatpush1.bf16.msra.mxu0 %v1637
  %2232 = vmatprep.subr.bf16.mxu0 0
  %2233 = vmatpush1.bf16.msra.mxu0 %v1638
  %2234 = vmatprep.subr.bf16.mxu0 0
  %2235 = vmatpush1.bf16.msra.mxu0 %v1639
  %2236 = vmatprep.subr.bf16.mxu0 0
  %2237 = vmatpush1.bf16.msra.mxu0 %v1640
  %2238 = vmatprep.subr.bf16.mxu0 0
  %2239 = vmatpush1.bf16.msra.mxu0 %v1641
  %2240 = vmatprep.subr.bf16.mxu0 0
  %2241 = vmatpush1.bf16.msra.mxu0 %v1642
  %2242 = vmatprep.subr.bf16.mxu0 0
  %2243 = vmatpush1.bf16.msra.mxu0 %v1643
  %2244 = vmatprep.subr.bf16.mxu0 0
  %2245 = vmatpush1.bf16.msra.mxu0 %v1644
  %2246 = vmatprep.subr.bf16.mxu0 0
  %2247 = vmatpush1.bf16.msra.mxu0 %v1645
  %2248 = vmatprep.subr.bf16.mxu0 0
  %2249 = vmatpush1.bf16.msra.mxu0 %v1646
  %2250 = vmatprep.subr.bf16.mxu0 0
  %2251 = vmatpush1.bf16.msra.mxu0 %v1647
  %2252 = vmatprep.mubr.bf16.mxu0 %v643
  %2253 = vmatmul.mubr.bf16.gmra.mrb[0].mxu0 %v642
  %v2254 = vpop.f32.mrb[0].mxu0
  %v2255 = vadd.f32 %v2206, %v2254
  %v2256 = vpop.f32.mrb[0].mxu0
  %v2257 = vpop.f32.mrb[0].mxu0
  %v2258 = vadd.f32 %v2209, %v2257
  %v2259 = vpop.f32.mrb[0].mxu0
  %2260 = vmatprep.mubr.bf16.mxu0 %v669
  %2261 = vmatmul.mubr.bf16.gmra.mrb[0].mxu0 %v668
  %v2262 = vpop.f32.mrb[0].mxu0
  %v2263 = vadd.f32 %v2214, %v2262
  %v2264 = vpop.f32.mrb[0].mxu0
  %v2265 = vpop.f32.mrb[0].mxu0
  %v2266 = vadd.f32 %v2217, %v2265
  %v2267 = vpop.f32.mrb[0].mxu0
  %2268 = vdwg.mxu0
  %2269 = vmatprep.subr.bf16.mxu0 0
  %2270 = vmatpush1.bf16.msra.mxu0 %v1648
  %2271 = vmatprep.subr.bf16.mxu0 0
  %2272 = vmatpush1.bf16.msra.mxu0 %v1649
  %2273 = vmatprep.subr.bf16.mxu0 0
  %2274 = vmatpush1.bf16.msra.mxu0 %v1650
  %2275 = vmatprep.subr.bf16.mxu0 0
  %2276 = vmatpush1.bf16.msra.mxu0 %v1651
  %2277 = vmatprep.subr.bf16.mxu0 0
  %2278 = vmatpush1.bf16.msra.mxu0 %v1652
  %2279 = vmatprep.subr.bf16.mxu0 0
  %2280 = vmatpush1.bf16.msra.mxu0 %v1653
  %2281 = vmatprep.subr.bf16.mxu0 0
  %2282 = vmatpush1.bf16.msra.mxu0 %v1654
  %2283 = vmatprep.subr.bf16.mxu0 0
  %2284 = vmatpush1.bf16.msra.mxu0 %v1655
  %2285 = vmatprep.subr.bf16.mxu0 0
  %2286 = vmatpush1.bf16.msra.mxu0 %v1656
  %2287 = vmatprep.subr.bf16.mxu0 0
  %2288 = vmatpush1.bf16.msra.mxu0 %v1657
  %2289 = vmatprep.subr.bf16.mxu0 0
  %2290 = vmatpush1.bf16.msra.mxu0 %v1658
  %2291 = vmatprep.subr.bf16.mxu0 0
  %2292 = vmatpush1.bf16.msra.mxu0 %v1659
  %2293 = vmatprep.subr.bf16.mxu0 0
  %2294 = vmatpush1.bf16.msra.mxu0 %v1660
  %2295 = vmatprep.subr.bf16.mxu0 0
  %2296 = vmatpush1.bf16.msra.mxu0 %v1661
  %2297 = vmatprep.subr.bf16.mxu0 0
  %2298 = vmatpush1.bf16.msra.mxu0 %v1662
  %2299 = vmatprep.subr.bf16.mxu0 0
  %2300 = vmatpush1.bf16.msra.mxu0 %v1663
  %2301 = vmatprep.mubr.bf16.mxu0 %v645
  %2302 = vmatmul.mubr.bf16.gmra.mrb[0].mxu0 %v644
  %v2303 = vpop.f32.mrb[0].mxu0
  %v2304 = vadd.f32 %v2255, %v2303
  %v2305 = vpop.f32.mrb[0].mxu0
  %v2306 = vpop.f32.mrb[0].mxu0
  %v2307 = vadd.f32 %v2258, %v2306
  %v2308 = vpop.f32.mrb[0].mxu0
  %2309 = vmatprep.mubr.bf16.mxu0 %v671
  %2310 = vmatmul.mubr.bf16.gmra.mrb[0].mxu0 %v670
  %v2311 = vpop.f32.mrb[0].mxu0
  %v2312 = vadd.f32 %v2263, %v2311
  %v2313 = vpop.f32.mrb[0].mxu0
  %v2314 = vpop.f32.mrb[0].mxu0
  %v2315 = vadd.f32 %v2266, %v2314
  %v2316 = vpop.f32.mrb[0].mxu0
  %2317 = vdwg.mxu0
  %2318 = vmatprep.subr.bf16.mxu0 0
  %2319 = vmatpush1.bf16.msra.mxu0 %v1664
  %2320 = vmatprep.subr.bf16.mxu0 0
  %2321 = vmatpush1.bf16.msra.mxu0 %v1665
  %2322 = vmatprep.subr.bf16.mxu0 0
  %2323 = vmatpush1.bf16.msra.mxu0 %v1666
  %2324 = vmatprep.subr.bf16.mxu0 0
  %2325 = vmatpush1.bf16.msra.mxu0 %v1667
  %2326 = vmatprep.subr.bf16.mxu0 0
  %2327 = vmatpush1.bf16.msra.mxu0 %v1668
  %2328 = vmatprep.subr.bf16.mxu0 0
  %2329 = vmatpush1.bf16.msra.mxu0 %v1669
  %2330 = vmatprep.subr.bf16.mxu0 0
  %2331 = vmatpush1.bf16.msra.mxu0 %v1670
  %2332 = vmatprep.subr.bf16.mxu0 0
  %2333 = vmatpush1.bf16.msra.mxu0 %v1671
  %2334 = vmatprep.subr.bf16.mxu0 0
  %2335 = vmatpush1.bf16.msra.mxu0 %v1672
  %2336 = vmatprep.subr.bf16.mxu0 0
  %2337 = vmatpush1.bf16.msra.mxu0 %v1673
  %2338 = vmatprep.subr.bf16.mxu0 0
  %2339 = vmatpush1.bf16.msra.mxu0 %v1674
  %2340 = vmatprep.subr.bf16.mxu0 0
  %2341 = vmatpush1.bf16.msra.mxu0 %v1675
  %2342 = vmatprep.subr.bf16.mxu0 0
  %2343 = vmatpush1.bf16.msra.mxu0 %v1676
  %2344 = vmatprep.subr.bf16.mxu0 0
  %2345 = vmatpush1.bf16.msra.mxu0 %v1677
  %2346 = vmatprep.subr.bf16.mxu0 0
  %2347 = vmatpush1.bf16.msra.mxu0 %v1678
  %2348 = vmatprep.subr.bf16.mxu0 0
  %2349 = vmatpush1.bf16.msra.mxu0 %v1679
  %2350 = vmatprep.mubr.bf16.mxu0 %v647
  %2351 = vmatmul.mubr.bf16.gmra.mrb[0].mxu0 %v646
  %v2352 = vpop.f32.mrb[0].mxu0
  %v2353 = vadd.f32 %v2304, %v2352
  %v2354 = vpop.f32.mrb[0].mxu0
  %v2355 = vpop.f32.mrb[0].mxu0
  %v2356 = vadd.f32 %v2307, %v2355
  %v2357 = vpop.f32.mrb[0].mxu0
  %2358 = vmatprep.mubr.bf16.mxu0 %v673
  %2359 = vmatmul.mubr.bf16.gmra.mrb[0].mxu0 %v672
  %v2360 = vpop.f32.mrb[0].mxu0
  %v2361 = vadd.f32 %v2312, %v2360
  %v2362 = vpop.f32.mrb[0].mxu0
  %v2363 = vpop.f32.mrb[0].mxu0
  %v2364 = vadd.f32 %v2315, %v2363
  %v2365 = vpop.f32.mrb[0].mxu0
  %2366 = vdwg.mxu0
  %2367 = vmatprep.subr.bf16.mxu0 0
  %2368 = vmatpush1.bf16.msra.mxu0 %v1680
  %2369 = vmatprep.subr.bf16.mxu0 0
  %2370 = vmatpush1.bf16.msra.mxu0 %v1681
  %2371 = vmatprep.subr.bf16.mxu0 0
  %2372 = vmatpush1.bf16.msra.mxu0 %v1682
  %2373 = vmatprep.subr.bf16.mxu0 0
  %2374 = vmatpush1.bf16.msra.mxu0 %v1683
  %2375 = vmatprep.subr.bf16.mxu0 0
  %2376 = vmatpush1.bf16.msra.mxu0 %v1684
  %2377 = vmatprep.subr.bf16.mxu0 0
  %2378 = vmatpush1.bf16.msra.mxu0 %v1685
  %2379 = vmatprep.subr.bf16.mxu0 0
  %2380 = vmatpush1.bf16.msra.mxu0 %v1686
  %2381 = vmatprep.subr.bf16.mxu0 0
  %2382 = vmatpush1.bf16.msra.mxu0 %v1687
  %2383 = vmatprep.subr.bf16.mxu0 0
  %2384 = vmatpush1.bf16.msra.mxu0 %v1688
  %2385 = vmatprep.subr.bf16.mxu0 0
  %2386 = vmatpush1.bf16.msra.mxu0 %v1689
  %2387 = vmatprep.subr.bf16.mxu0 0
  %2388 = vmatpush1.bf16.msra.mxu0 %v1690
  %2389 = vmatprep.subr.bf16.mxu0 0
  %2390 = vmatpush1.bf16.msra.mxu0 %v1691
  %2391 = vmatprep.subr.bf16.mxu0 0
  %2392 = vmatpush1.bf16.msra.mxu0 %v1692
  %2393 = vmatprep.subr.bf16.mxu0 0
  %2394 = vmatpush1.bf16.msra.mxu0 %v1693
  %2395 = vmatprep.subr.bf16.mxu0 0
  %2396 = vmatpush1.bf16.msra.mxu0 %v1694
  %2397 = vmatprep.subr.bf16.mxu0 0
  %2398 = vmatpush1.bf16.msra.mxu0 %v1695
  %2399 = vmatprep.mubr.bf16.mxu0 %v649
  %2400 = vmatmul.mubr.bf16.gmra.mrb[0].mxu0 %v648
  %v2401 = vpop.f32.mrb[0].mxu0
  %v2402 = vadd.f32 %v2353, %v2401
  %v2403 = vpop.f32.mrb[0].mxu0
  %v2404 = vpop.f32.mrb[0].mxu0
  %v2405 = vadd.f32 %v2356, %v2404
  %v2406 = vpop.f32.mrb[0].mxu0
  %2407 = vmatprep.mubr.bf16.mxu0 %v675
  %2408 = vmatmul.mubr.bf16.gmra.mrb[0].mxu0 %v674
  %v2409 = vpop.f32.mrb[0].mxu0
  %v2410 = vadd.f32 %v2361, %v2409
  %v2411 = vpop.f32.mrb[0].mxu0
  %v2412 = vpop.f32.mrb[0].mxu0
  %v2413 = vadd.f32 %v2364, %v2412
  %v2414 = vpop.f32.mrb[0].mxu0
  %2415 = vdwg.mxu0
  %2416 = vmatprep.subr.bf16.mxu0 0
  %2417 = vmatpush1.bf16.msra.mxu0 %v1696
  %2418 = vmatprep.subr.bf16.mxu0 0
  %2419 = vmatpush1.bf16.msra.mxu0 %v1697
  %2420 = vmatprep.subr.bf16.mxu0 0
  %2421 = vmatpush1.bf16.msra.mxu0 %v1698
  %2422 = vmatprep.subr.bf16.mxu0 0
  %2423 = vmatpush1.bf16.msra.mxu0 %v1699
  %2424 = vmatprep.subr.bf16.mxu0 0
  %2425 = vmatpush1.bf16.msra.mxu0 %v1700
  %2426 = vmatprep.subr.bf16.mxu0 0
  %2427 = vmatpush1.bf16.msra.mxu0 %v1701
  %2428 = vmatprep.subr.bf16.mxu0 0
  %2429 = vmatpush1.bf16.msra.mxu0 %v1702
  %2430 = vmatprep.subr.bf16.mxu0 0
  %2431 = vmatpush1.bf16.msra.mxu0 %v1703
  %2432 = vmatprep.subr.bf16.mxu0 0
  %2433 = vmatpush1.bf16.msra.mxu0 %v1704
  %2434 = vmatprep.subr.bf16.mxu0 0
  %2435 = vmatpush1.bf16.msra.mxu0 %v1705
  %2436 = vmatprep.subr.bf16.mxu0 0
  %2437 = vmatpush1.bf16.msra.mxu0 %v1706
  %2438 = vmatprep.subr.bf16.mxu0 0
  %2439 = vmatpush1.bf16.msra.mxu0 %v1707
  %2440 = vmatprep.subr.bf16.mxu0 0
  %2441 = vmatpush1.bf16.msra.mxu0 %v1708
  %2442 = vmatprep.subr.bf16.mxu0 0
  %2443 = vmatpush1.bf16.msra.mxu0 %v1709
  %2444 = vmatprep.subr.bf16.mxu0 0
  %2445 = vmatpush1.bf16.msra.mxu0 %v1710
  %2446 = vmatprep.subr.bf16.mxu0 0
  %2447 = vmatpush1.bf16.msra.mxu0 %v1711
  %2448 = vmatprep.mubr.bf16.mxu0 %v651
  %2449 = vmatmul.mubr.bf16.gmra.mrb[0].mxu0 %v650
  %v2450 = vpop.f32.mrb[0].mxu0
  %v2451 = vadd.f32 %v2402, %v2450
  %v2452 = vpop.f32.mrb[0].mxu0
  %v2453 = vpop.f32.mrb[0].mxu0
  %v2454 = vadd.f32 %v2405, %v2453
  %v2455 = vpop.f32.mrb[0].mxu0
  %2456 = vmatprep.mubr.bf16.mxu0 %v677
  %2457 = vmatmul.mubr.bf16.gmra.mrb[0].mxu0 %v676
  %v2458 = vpop.f32.mrb[0].mxu0
  %v2459 = vadd.f32 %v2410, %v2458
  %v2460 = vpop.f32.mrb[0].mxu0
  %v2461 = vpop.f32.mrb[0].mxu0
  %v2462 = vadd.f32 %v2413, %v2461
  %v2463 = vpop.f32.mrb[0].mxu0
  %2464 = vdwg.mxu0
  %2465 = vmatprep.subr.bf16.mxu0 0
  %2466 = vmatpush1.bf16.msra.mxu0 %v1712
  %2467 = vmatprep.subr.bf16.mxu0 0
  %2468 = vmatpush1.bf16.msra.mxu0 %v1713
  %2469 = vmatprep.subr.bf16.mxu0 0
  %2470 = vmatpush1.bf16.msra.mxu0 %v1714
  %2471 = vmatprep.subr.bf16.mxu0 0
  %2472 = vmatpush1.bf16.msra.mxu0 %v1715
  %2473 = vmatprep.subr.bf16.mxu0 0
  %2474 = vmatpush1.bf16.msra.mxu0 %v1716
  %2475 = vmatprep.subr.bf16.mxu0 0
  %2476 = vmatpush1.bf16.msra.mxu0 %v1717
  %2477 = vmatprep.subr.bf16.mxu0 0
  %2478 = vmatpush1.bf16.msra.mxu0 %v1718
  %2479 = vmatprep.subr.bf16.mxu0 0
  %2480 = vmatpush1.bf16.msra.mxu0 %v1719
  %2481 = vmatprep.subr.bf16.mxu0 0
  %2482 = vmatpush1.bf16.msra.mxu0 %v1720
  %2483 = vmatprep.subr.bf16.mxu0 0
  %2484 = vmatpush1.bf16.msra.mxu0 %v1721
  %2485 = vmatprep.subr.bf16.mxu0 0
  %2486 = vmatpush1.bf16.msra.mxu0 %v1722
  %2487 = vmatprep.subr.bf16.mxu0 0
  %2488 = vmatpush1.bf16.msra.mxu0 %v1723
  %2489 = vmatprep.subr.bf16.mxu0 0
  %2490 = vmatpush1.bf16.msra.mxu0 %v1724
  %2491 = vmatprep.subr.bf16.mxu0 0
  %2492 = vmatpush1.bf16.msra.mxu0 %v1725
  %2493 = vmatprep.subr.bf16.mxu0 0
  %2494 = vmatpush1.bf16.msra.mxu0 %v1726
  %2495 = vmatprep.subr.bf16.mxu0 0
  %2496 = vmatpush1.bf16.msra.mxu0 %v1727
  %2497 = vmatprep.mubr.bf16.mxu0 %v653
  %2498 = vmatmul.mubr.bf16.gmra.mrb[0].mxu0 %v652
  %v2499 = vpop.f32.mrb[0].mxu0
  %v2500 = vadd.f32 %v2451, %v2499
  %v2501 = vpop.f32.mrb[0].mxu0
  %v2502 = vpop.f32.mrb[0].mxu0
  %v2503 = vadd.f32 %v2454, %v2502
  %v2504 = vpop.f32.mrb[0].mxu0
  %2505 = vmatprep.mubr.bf16.mxu0 %v679
  %2506 = vmatmul.mubr.bf16.gmra.mrb[0].mxu0 %v678
  %v2507 = vpop.f32.mrb[0].mxu0
  %v2508 = vadd.f32 %v2459, %v2507
  %v2509 = vpop.f32.mrb[0].mxu0
  %v2510 = vpop.f32.mrb[0].mxu0
  %v2511 = vadd.f32 %v2462, %v2510
  %v2512 = vpop.f32.mrb[0].mxu0
  %2513 = vdwg.mxu0
  %2514 = vmatprep.subr.bf16.mxu0 0
  %2515 = vmatpush1.bf16.msra.mxu0 %v1728
  %2516 = vmatprep.subr.bf16.mxu0 0
  %2517 = vmatpush1.bf16.msra.mxu0 %v1729
  %2518 = vmatprep.subr.bf16.mxu0 0
  %2519 = vmatpush1.bf16.msra.mxu0 %v1730
  %2520 = vmatprep.subr.bf16.mxu0 0
  %2521 = vmatpush1.bf16.msra.mxu0 %v1731
  %2522 = vmatprep.subr.bf16.mxu0 0
  %2523 = vmatpush1.bf16.msra.mxu0 %v1732
  %2524 = vmatprep.subr.bf16.mxu0 0
  %2525 = vmatpush1.bf16.msra.mxu0 %v1733
  %2526 = vmatprep.subr.bf16.mxu0 0
  %2527 = vmatpush1.bf16.msra.mxu0 %v1734
  %2528 = vmatprep.subr.bf16.mxu0 0
  %2529 = vmatpush1.bf16.msra.mxu0 %v1735
  %2530 = vmatprep.subr.bf16.mxu0 0
  %2531 = vmatpush1.bf16.msra.mxu0 %v1736
  %2532 = vmatprep.subr.bf16.mxu0 0
  %2533 = vmatpush1.bf16.msra.mxu0 %v1737
  %2534 = vmatprep.subr.bf16.mxu0 0
  %2535 = vmatpush1.bf16.msra.mxu0 %v1738
  %2536 = vmatprep.subr.bf16.mxu0 0
  %2537 = vmatpush1.bf16.msra.mxu0 %v1739
  %2538 = vmatprep.subr.bf16.mxu0 0
  %2539 = vmatpush1.bf16.msra.mxu0 %v1740
  %2540 = vmatprep.subr.bf16.mxu0 0
  %2541 = vmatpush1.bf16.msra.mxu0 %v1741
  %2542 = vmatprep.subr.bf16.mxu0 0
  %2543 = vmatpush1.bf16.msra.mxu0 %v1742
  %2544 = vmatprep.subr.bf16.mxu0 0
  %2545 = vmatpush1.bf16.msra.mxu0 %v1743
  %2546 = vmatprep.mubr.bf16.mxu0 %v655
  %2547 = vmatmul.mubr.bf16.gmra.mrb[0].mxu0 %v654
  %v2548 = vpop.f32.mrb[0].mxu0
  %v2549 = vadd.f32 %v2500, %v2548
  %v2550 = vpop.f32.mrb[0].mxu0
  %v2551 = vpop.f32.mrb[0].mxu0
  %v2552 = vadd.f32 %v2503, %v2551
  %v2553 = vpop.f32.mrb[0].mxu0
  %2554 = vmatprep.mubr.bf16.mxu0 %v681
  %2555 = vmatmul.mubr.bf16.gmra.mrb[0].mxu0 %v680
  %v2556 = vpop.f32.mrb[0].mxu0
  %v2557 = vadd.f32 %v2508, %v2556
  %v2558 = vpop.f32.mrb[0].mxu0
  %v2559 = vpop.f32.mrb[0].mxu0
  %v2560 = vadd.f32 %v2511, %v2559
  %v2561 = vpop.f32.mrb[0].mxu0
  %2562 = vdwg.mxu0
  %2563 = vmatprep.subr.bf16.mxu0 0
  %2564 = vmatpush1.bf16.msra.mxu0 %v1744
  %2565 = vmatprep.subr.bf16.mxu0 0
  %2566 = vmatpush1.bf16.msra.mxu0 %v1745
  %2567 = vmatprep.subr.bf16.mxu0 0
  %2568 = vmatpush1.bf16.msra.mxu0 %v1746
  %2569 = vmatprep.subr.bf16.mxu0 0
  %2570 = vmatpush1.bf16.msra.mxu0 %v1747
  %2571 = vmatprep.subr.bf16.mxu0 0
  %2572 = vmatpush1.bf16.msra.mxu0 %v1748
  %2573 = vmatprep.subr.bf16.mxu0 0
  %2574 = vmatpush1.bf16.msra.mxu0 %v1749
  %2575 = vmatprep.subr.bf16.mxu0 0
  %2576 = vmatpush1.bf16.msra.mxu0 %v1750
  %2577 = vmatprep.subr.bf16.mxu0 0
  %2578 = vmatpush1.bf16.msra.mxu0 %v1751
  %2579 = vmatprep.subr.bf16.mxu0 0
  %2580 = vmatpush1.bf16.msra.mxu0 %v1752
  %2581 = vmatprep.subr.bf16.mxu0 0
  %2582 = vmatpush1.bf16.msra.mxu0 %v1753
  %2583 = vmatprep.subr.bf16.mxu0 0
  %2584 = vmatpush1.bf16.msra.mxu0 %v1754
  %2585 = vmatprep.subr.bf16.mxu0 0
  %2586 = vmatpush1.bf16.msra.mxu0 %v1755
  %2587 = vmatprep.subr.bf16.mxu0 0
  %2588 = vmatpush1.bf16.msra.mxu0 %v1973
  %2589 = vmatprep.subr.bf16.mxu0 0
  %2590 = vmatpush1.bf16.msra.mxu0 0
  %2591 = vmatprep.subr.bf16.mxu0 0
  %2592 = vmatpush1.bf16.msra.mxu0 0
  %2593 = vmatprep.subr.bf16.mxu0 0
  %2594 = vmatpush1.bf16.msra.mxu0 0
  %2595 = vmatprep.mubr.bf16.mxu0 %v1963
  %2596 = vmatmul.mubr.bf16.gmra.mrb[0].mxu0 %v656
  %v2597 = vpop.f32.mrb[0].mxu0
  %v2598 = vadd.f32 %v2549, %v2597
  %v2599 = vpop.f32.mrb[0].mxu0
  %v2600 = vpop.f32.mrb[0].mxu0
  %v2601 = vadd.f32 %v2552, %v2600
  %v2602 = vpop.f32.mrb[0].mxu0
  %2603 = vmatprep.mubr.bf16.mxu0 %v1966
  %2604 = vmatmul.mubr.bf16.gmra.mrb[0].mxu0 %v682
  %v2605 = vpop.f32.mrb[0].mxu0
  %v2606 = vadd.f32 %v2557, %v2605
  %v2607 = vpop.f32.mrb[0].mxu0
  %v2608 = vpop.f32.mrb[0].mxu0
  %v2609 = vadd.f32 %v2560, %v2608
  %v2610 = vpop.f32.mrb[0].mxu0
  %2611 = vdwg.mxu0
  %v2612 = vld [vmem:[%s2] sm:$0x3]
  %v2613 = vlaneseq
  %v2614 = vshrl.u32 %v2613, 7
  %v2615 = vsub.s32 0, %v2614
  %v2616 = vrot.slane %v2612, %v2615
  %v2617 = vmul.f32 %v2598, %v2616
  %v2618 = vmul.f32 %v2601, %v2616
  %v2619 = vmul.f32 %v2606, %v2616
  %v2620 = vmul.f32 %v2609, %v2616
  %v2621 = vlaneseq
  %v2622 = vshrl.u32 %v2621, 7
  %v2623 = vsub.s32 1, %v2622
  %v2624 = vrot.slane %v2612, %v2623
  %v2625 = vadd.f32 %v2617, %v2624
  %v2626 = vadd.f32 %v2618, %v2624
  %v2627 = vadd.f32 %v2619, %v2624
  %v2628 = vadd.f32 %v2620, %v2624
  %v2629 = vmax.f32 %v2625, 0.0
  %v2630 = vmax.f32 %v2626, 0.0
  %v2631 = vmax.f32 %v2627, 0.0
  %v2632 = vmax.f32 %v2628, 0.0
  %v2633 = vpack.c.bf16 %v2630, %v2629
  %v2634 = vpack.c.bf16 %v2632, %v2631
  %v2637 = vunpack.c.l.b16 %v2633
  %v2638 = vunpack.c.h.b16 %v2633
  %v2639 = vunpack.c.l.b16 %v2634
  %v2640 = vunpack.c.h.b16 %v2634
  %v2641 = vpack.c.b16 %v2637, %v2637
  %v2642 = vpack.c.b16 %v2638, %v2638
  %v2643 = vpack.c.b16 %v2639, %v2639
  %v2644 = vpack.c.b16 %v2640, %v2640
  %2649 = vst [vmem:[%s3] sm:$0xf] %v2641
  %2650 = vst [vmem:[%s3 + $0x4] sm:$0xf] %v2642
  %2651 = vst [vmem:[%s3 + $0x8] sm:$0xf] %v2643
  %2652 = vst [vmem:[%s3 + $0xc] sm:$0xf] %v2644
  // Predicated region
  $region14: #{_front_forward.1} parent=0 // pred_check
    _
  $region15: #{_front_forward.1} parent=0 // pred_check_branch
    %2654 = sbr.rel (0) target = $region17
  $region16: #{_front_forward.1} parent=0 // pred_region
    _
  $region17: #{_front_forward.1} parent=0 // pred_fallthru
    _
  // Predicated region
  $region18: #{_front_forward.1} parent=0 // pred_check
    _
  $region19: #{_front_forward.1} parent=0 // pred_check_branch
    %2656 = sbr.rel (0) target = $region21
  $region20: #{_front_forward.1} parent=0 // pred_region
    _
  $region21: #{_front_forward.1} parent=0 // pred_fallthru
    _

</llo_original>
